<compile_context>
chip_gen: v7x
topology: tpu7x:2x2x1
jax: 0.10.0
libtpu: 0.0.40
codegen_flags: <defaults>
</compile_context>

<pallas_src>
import jax
import jax.numpy as jnp
from jax import lax
from jax.experimental import pallas as pl
from jax.experimental.pallas import tpu as pltpu

EPS = 1e-5
LANE = 128
VMEM_LIMIT = 64 * 1024 * 1024


def _round_up(x, m):
    return (x + m - 1) // m * m


# ---------------------------------------------------------------------------
# Kernel 1: 3x3 conv (stride 1, pad 1) + per-channel sum / sum-of-squares
# ---------------------------------------------------------------------------
def _conv3x3_stats_kernel(x0_ref, x1_ref, x2_ref, w_ref, y_ref, s_ref, ss_ref):
    @pl.when((pl.program_id(0) == 0) & (pl.program_id(1) == 0))
    def _init():
        s_ref[...] = jnp.zeros_like(s_ref)
        ss_ref[...] = jnp.zeros_like(ss_ref)

    w_out, c_out = y_ref.shape                       # (Win, Cmid_p)
    rows = (x0_ref[...], x1_ref[...], x2_ref[...])   # each (Win+2, Cin_p) bf16
    acc = jnp.zeros((w_out, c_out), jnp.float32)
    for kh in range(3):
        row = rows[kh]
        for kw in range(3):
            acc = acc + jnp.dot(row[kw:kw + w_out, :], w_ref[kh, kw],
                                preferred_element_type=jnp.float32)
    y_ref[...] = acc.astype(y_ref.dtype)
    s_ref[...] += jnp.sum(acc, axis=0, keepdims=True)
    ss_ref[...] += jnp.sum(acc * acc, axis=0, keepdims=True)


def conv3x3_with_stats(xp, w):
    """xp: (N, H+2, W+2, Cin_p) bf16 (spatially pre-padded); w: (3,3,Cin_p,Cmid_p) bf16."""
    N, hp2, wp2, cin = xp.shape
    hin, win = hp2 - 2, wp2 - 2
    cmid = w.shape[-1]

    def tap_spec(k):
        # H block size is 1 -> block index along H equals the element row; the
        # +k offset selects the kh-th tap row of the padded input (no halo copy).
        return pl.BlockSpec((None, None, wp2, cin),
                            lambda n, h: (n, h + k, 0, 0))

    return pl.pallas_call(
        _conv3x3_stats_kernel,
        grid=(N, hin),
        in_specs=[tap_spec(0), tap_spec(1), tap_spec(2),
                  pl.BlockSpec((3, 3, cin, cmid), lambda n, h: (0, 0, 0, 0))],
        out_specs=(pl.BlockSpec((None, None, win, cmid), lambda n, h: (n, h, 0, 0)),
                   pl.BlockSpec((1, cmid), lambda n, h: (0, 0)),
                   pl.BlockSpec((1, cmid), lambda n, h: (0, 0))),
        out_shape=(jax.ShapeDtypeStruct((N, hin, win, cmid), jnp.bfloat16),
                   jax.ShapeDtypeStruct((1, cmid), jnp.float32),
                   jax.ShapeDtypeStruct((1, cmid), jnp.float32)),
        compiler_params=pltpu.CompilerParams(
            # the stats outputs are a single resident accumulator across the
            # whole grid -> both axes must be sequential.
            dimension_semantics=("arbitrary", "arbitrary"),
            vmem_limit_bytes=VMEM_LIMIT),
    )(xp, xp, xp, w)


# ---------------------------------------------------------------------------
# Kernel 2: fused BatchNorm(scale/shift) + ReLU + 1x1 classification conv + bias
# ---------------------------------------------------------------------------
def _bn_relu_classify_kernel(y_ref, scale_ref, shift_ref, wc_ref, bias_ref, o_ref):
    h = y_ref[...].astype(jnp.float32) * scale_ref[...] + shift_ref[...]
    h = jnp.maximum(h, 0.0)
    o_ref[...] = (jnp.dot(h.astype(wc_ref.dtype), wc_ref[...],
                          preferred_element_type=jnp.float32) + bias_ref[...])


def bn_relu_classify(y, scale, shift, wc, bias):
    M, cmid = y.shape
    ccls = wc.shape[1]
    tm = M
    for cand in (1024, 512, 256, 128, 64, 32, 16, 8):
        if M % cand == 0:
            tm = cand
            break
    return pl.pallas_call(
        _bn_relu_classify_kernel,
        grid=(M // tm,),
        in_specs=[pl.BlockSpec((tm, cmid), lambda i: (i, 0)),
                  pl.BlockSpec((1, cmid), lambda i: (0, 0)),
                  pl.BlockSpec((1, cmid), lambda i: (0, 0)),
                  pl.BlockSpec((cmid, ccls), lambda i: (0, 0)),
                  pl.BlockSpec((1, ccls), lambda i: (0, 0))],
        out_specs=pl.BlockSpec((tm, ccls), lambda i: (i, 0)),
        out_shape=jax.ShapeDtypeStruct((M, ccls), jnp.float32),
        compiler_params=pltpu.CompilerParams(
            dimension_semantics=("parallel",),
            vmem_limit_bytes=VMEM_LIMIT),
    )(y, scale, shift, wc, bias)


# ---------------------------------------------------------------------------
# Kernel 3: per-batch matmul  out[b] = a @ x[b]   (used for both resize passes)
# ---------------------------------------------------------------------------
def _bmm_kernel(a_ref, x_ref, o_ref):
    o_ref[...] = jnp.dot(a_ref[...], x_ref[...],
                         preferred_element_type=jnp.float32)


def batched_matmul(a, x):
    """a: (Mo, K) f32, x: (B, K, L) f32 -> (B, Mo, L) f32."""
    mo, k = a.shape
    B, _, L = x.shape
    kp = _round_up(k, 8)                        # sublane-align the contraction dim
    if kp != k:
        a = jnp.pad(a, ((0, 0), (0, kp - k)))
        x = jnp.pad(x, ((0, 0), (0, kp - k), (0, 0)))
    return pl.pallas_call(
        _bmm_kernel,
        grid=(B,),
        in_specs=[pl.BlockSpec((mo, kp), lambda b: (0, 0)),
                  pl.BlockSpec((None, kp, L), lambda b: (b, 0, 0))],
        out_specs=pl.BlockSpec((None, mo, L), lambda b: (b, 0, 0)),
        out_shape=jax.ShapeDtypeStruct((B, mo, L), jnp.float32),
        compiler_params=pltpu.CompilerParams(
            dimension_semantics=("parallel",),
            vmem_limit_bytes=VMEM_LIMIT),
    )(a, x)


# ---------------------------------------------------------------------------
# Bilinear (align_corners=True) interpolation matrices
# ---------------------------------------------------------------------------
def _bilinear_matrix(out_size, in_size):
    if in_size == 1:
        return jnp.ones((out_size, 1), jnp.float32)
    if out_size == 1:
        return jnp.zeros((1, in_size), jnp.float32).at[0, 0].set(1.0)
    scale = (in_size - 1) / (out_size - 1)
    src = jnp.arange(out_size, dtype=jnp.float32) * scale
    i0 = jnp.clip(jnp.floor(src).astype(jnp.int32), 0, in_size - 2)
    frac = src - i0.astype(jnp.float32)
    rows = jnp.arange(out_size)
    A = jnp.zeros((out_size, in_size), jnp.float32)
    A = A.at[rows, i0].add(1.0 - frac)
    A = A.at[rows, i0 + 1].add(frac)
    return A


# ---------------------------------------------------------------------------
# Full forward
# ---------------------------------------------------------------------------
def decode_psp_feature_forward(x_nchw, params, height, width):
    N, cin, hin, win = x_nchw.shape
    cmid = params["gamma"].shape[0]
    n_classes = params["b_cls"].shape[0]
    cin_p, cmid_p, ccls_p = (_round_up(c, LANE) for c in (cin, cmid, n_classes))

    # ---- layout: NHWC, channel-pad to lane multiples, spatial pad for the 3x3 ----
    x = jnp.transpose(x_nchw, (0, 2, 3, 1)).astype(jnp.float32)
    x = jnp.pad(x, ((0, 0), (0, 0), (0, 0), (0, cin_p - cin)))
    xp = jnp.pad(x, ((0, 0), (1, 1), (1, 1), (0, 0))).astype(jnp.bfloat16)

    w3 = jnp.pad(params["w_cbr"],
                 ((0, cmid_p - cmid), (0, cin_p - cin), (0, 0), (0, 0)))
    w3 = jnp.transpose(w3, (2, 3, 1, 0)).astype(jnp.bfloat16)      # (3,3,Cin_p,Cmid_p)

    # ---- cbr: 3x3 conv + BatchNorm statistics (kernel 1) ----
    y, s, ss = conv3x3_with_stats(xp, w3)

    # fold BatchNorm (training-mode batch statistics, biased variance) into scale/shift
    count = float(N * hin * win)
    mean = s / count
    var = jnp.maximum(ss / count - mean * mean, 0.0)
    inv = lax.rsqrt(var + EPS)
    gamma = jnp.pad(params["gamma"], (0, cmid_p - cmid)).reshape(1, cmid_p)
    beta = jnp.pad(params["beta"], (0, cmid_p - cmid)).reshape(1, cmid_p)
    scale = gamma * inv
    shift = beta - mean * scale

    # TODO(synk): nn.Dropout2d(p=0.1) train-mode stochastic channel dropout is
    # omitted (inference behaviour == identity).

    # ---- BN + ReLU fused with the 1x1 classification conv (kernel 2) ----
    wc = jnp.pad(params["w_cls"][:, :, 0, 0],
                 ((0, ccls_p - n_classes), (0, cmid_p - cmid)))
    wc = jnp.transpose(wc, (1, 0)).astype(jnp.bfloat16)            # (Cmid_p, Ccls_p)
    bc = jnp.pad(params["b_cls"], (0, ccls_p - n_classes)).reshape(1, ccls_p)
    logits = bn_relu_classify(y.reshape(N * hin * win, cmid_p), scale, shift, wc, bc)

    # ---- bilinear resize (align_corners=True) as two batched matmuls (kernel 3) ----
    A_h = _bilinear_matrix(height, hin)
    A_w = _bilinear_matrix(width, win)
    t = batched_matmul(A_h, logits.reshape(N, hin, win * ccls_p))   # (N, height, win*Ccls_p)
    t = t.reshape(N, height, win, ccls_p).transpose(0, 2, 1, 3)
    t = t.reshape(N, win, height * ccls_p)
    u = batched_matmul(A_w, t)                                      # (N, width, height*Ccls_p)
    u = u.reshape(N, width, height, ccls_p).transpose(0, 2, 1, 3)   # (N, height, width, Ccls_p)

    out = u[..., :n_classes]
    return jnp.transpose(out, (0, 3, 1, 2))                         # NCHW


# ---------------------------------------------------------------------------
# Pure-JAX reference (same bf16 quantization points; BN stats in f32)
# ---------------------------------------------------------------------------
def reference(x_nchw, params, height, width):
    f32, bf16 = jnp.float32, jnp.bfloat16
    x = jnp.transpose(x_nchw, (0, 2, 3, 1)).astype(bf16).astype(f32)
    w = jnp.transpose(params["w_cbr"], (2, 3, 1, 0)).astype(bf16).astype(f32)
    y = lax.conv_general_dilated(
        x, w, window_strides=(1, 1), padding=[(1, 1), (1, 1)],
        dimension_numbers=("NHWC", "HWIO", "NHWC"),
        precision=lax.Precision.HIGHEST)
    mean = jnp.mean(y, axis=(0, 1, 2))
    var = jnp.mean((y - mean) ** 2, axis=(0, 1, 2))
    y_q = y.astype(bf16).astype(f32)                # kernel stores conv output as bf16
    h = jnp.maximum((y_q - mean) * lax.rsqrt(var + EPS) * params["gamma"]
                    + params["beta"], 0.0)
    # dropout: identity (inference)
    wc = jnp.transpose(params["w_cls"][:, :, 0, 0], (1, 0))
    logits = jnp.einsum("nhwc,cd->nhwd",
                        h.astype(bf16).astype(f32), wc.astype(bf16).astype(f32),
                        precision=lax.Precision.HIGHEST) + params["b_cls"]
    hin, win = x.shape[1], x.shape[2]
    A_h = _bilinear_matrix(height, hin)
    A_w = _bilinear_matrix(width, win)
    t = jnp.einsum("ih,nhwc->niwc", A_h, logits, precision=lax.Precision.HIGHEST)
    out = jnp.einsum("jw,niwc->nijc", A_w, t, precision=lax.Precision.HIGHEST)
    return jnp.transpose(out, (0, 3, 1, 2))


# ---------------------------------------------------------------------------
# Deterministic parameters + demo
# ---------------------------------------------------------------------------
def make_params(key, in_c, mid_c, n_classes):
    ks = jax.random.split(key, 5)
    w_cbr = jax.random.normal(ks[0], (mid_c, in_c, 3, 3), jnp.float32) / jnp.sqrt(in_c * 9.0)
    gamma = 1.0 + 0.1 * jax.random.normal(ks[1], (mid_c,), jnp.float32)
    beta = 0.1 * jax.random.normal(ks[2], (mid_c,), jnp.float32)
    w_cls = jax.random.normal(ks[3], (n_classes, mid_c, 1, 1), jnp.float32) / jnp.sqrt(float(mid_c))
    b_cls = 0.1 * jax.random.normal(ks[4], (n_classes,), jnp.float32)
    return dict(w_cbr=w_cbr, gamma=gamma, beta=beta, w_cls=w_cls, b_cls=b_cls)


if __name__ == "__main__":
    # Small shapes consistent with the module (real: in=4096, mid=512, 60x60 -> 475x475).
    N, in_c, hin, win = 2, 64, 8, 8
    mid_c, n_classes = 128, 21
    height, width = 16, 16

    key = jax.random.PRNGKey(0)
    kx, kp = jax.random.split(key)
    x = jax.random.normal(kx, (N, in_c, hin, win), jnp.float32)
    params = make_params(kp, in_c, mid_c, n_classes)

    out = decode_psp_feature_forward(x, params, height, width)
    out = jax.block_until_ready(out)

    ref = reference(x, params, height, width)
    assert out.shape == ref.shape == (N, n_classes, height, width), (out.shape, ref.shape)
    max_diff = float(jnp.max(jnp.abs(out - ref)))
    assert bool(jnp.allclose(out, ref, rtol=2e-2, atol=2e-2)), f"max abs diff {max_diff}"

    print("KERNEL_OK")
</pallas_src>

<mosaic_0001>
module attributes {stable_mosaic.version = 11 : i64} {
  func.func @_conv3x3_stats_kernel(%arg0: i32, %arg1: i32, %arg2: memref<1x1x10x128xbf16, #tpu.memory_space<vmem>>, %arg3: memref<1x1x10x128xbf16, #tpu.memory_space<vmem>>, %arg4: memref<1x1x10x128xbf16, #tpu.memory_space<vmem>>, %arg5: memref<3x3x128x128xbf16, #tpu.memory_space<vmem>>, %arg6: memref<1x1x8x128xbf16, #tpu.memory_space<vmem>>, %arg7: memref<1x128xf32, #tpu.memory_space<vmem>>, %arg8: memref<1x128xf32, #tpu.memory_space<vmem>>) attributes {dimension_semantics = [#tpu.dimension_semantics<arbitrary>, #tpu.dimension_semantics<arbitrary>], iteration_bounds = array<i64: 2, 8>, scalar_prefetch = 0 : i64, scratch_operands = 0 : i64, tpu.core_type = #tpu.core_type<tc>, window_params = [{transform_indices = @transform_0, window_bounds = array<i64: 1, 1, 10, 128>}, {transform_indices = @transform_1, window_bounds = array<i64: 1, 1, 10, 128>}, {transform_indices = @transform_2, window_bounds = array<i64: 1, 1, 10, 128>}, {pipeline_mode = #tpu.pipeline_mode<synchronous>, transform_indices = @transform_3, window_bounds = array<i64: 3, 3, 128, 128>}, {transform_indices = @transform_4, window_bounds = array<i64: 1, 1, 8, 128>}, {pipeline_mode = #tpu.pipeline_mode<synchronous>, transform_indices = @transform_5, window_bounds = array<i64: 1, 128>}, {pipeline_mode = #tpu.pipeline_mode<synchronous>, transform_indices = @transform_6, window_bounds = array<i64: 1, 128>}]} {
    %c0_i32 = arith.constant 0 : i32
    %0 = arith.cmpi eq, %arg0, %c0_i32 : i32
    %c0_i32_0 = arith.constant 0 : i32
    %1 = arith.cmpi eq, %arg1, %c0_i32_0 : i32
    %2 = arith.andi %0, %1 : i1
    %3 = arith.extui %2 : i1 to i32
    %c0_i32_1 = arith.constant 0 : i32
    %4 = arith.cmpi ne, %3, %c0_i32_1 : i32
    scf.if %4 {
      %cst_70 = arith.constant 0.000000e+00 : f32
      %72 = vector.broadcast %cst_70 : f32 to vector<1x128xf32>
      %c0_71 = arith.constant 0 : index
      %c0_72 = arith.constant 0 : index
      %73 = vector.load %arg7[%c0_71, %c0_72] : memref<1x128xf32, #tpu.memory_space<vmem>>, vector<1x128xf32>
      tpu.vector_store %arg7[%c0_71, %c0_72], %72 {strides = array<i32>} : memref<1x128xf32, #tpu.memory_space<vmem>>, vector<1x128xf32>,
      %cst_73 = arith.constant 0.000000e+00 : f32
      %74 = vector.broadcast %cst_73 : f32 to vector<1x128xf32>
      %c0_74 = arith.constant 0 : index
      %c0_75 = arith.constant 0 : index
      %75 = vector.load %arg8[%c0_74, %c0_75] : memref<1x128xf32, #tpu.memory_space<vmem>>, vector<1x128xf32>
      tpu.vector_store %arg8[%c0_74, %c0_75], %74 {strides = array<i32>} : memref<1x128xf32, #tpu.memory_space<vmem>>, vector<1x128xf32>,
    } else {
    }
    %c0 = arith.constant 0 : index
    %c0_2 = arith.constant 0 : index
    %c0_3 = arith.constant 0 : index
    %c0_4 = arith.constant 0 : index
    %5 = vector.load %arg2[%c0, %c0_2, %c0_3, %c0_4] : memref<1x1x10x128xbf16, #tpu.memory_space<vmem>>, vector<1x1x10x128xbf16>
    %6 = vector.shape_cast %5 : vector<1x1x10x128xbf16> to vector<10x128xbf16>
    %c0_5 = arith.constant 0 : index
    %c0_6 = arith.constant 0 : index
    %c0_7 = arith.constant 0 : index
    %c0_8 = arith.constant 0 : index
    %7 = vector.load %arg3[%c0_5, %c0_6, %c0_7, %c0_8] : memref<1x1x10x128xbf16, #tpu.memory_space<vmem>>, vector<1x1x10x128xbf16>
    %8 = vector.shape_cast %7 : vector<1x1x10x128xbf16> to vector<10x128xbf16>
    %c0_9 = arith.constant 0 : index
    %c0_10 = arith.constant 0 : index
    %c0_11 = arith.constant 0 : index
    %c0_12 = arith.constant 0 : index
    %9 = vector.load %arg4[%c0_9, %c0_10, %c0_11, %c0_12] : memref<1x1x10x128xbf16, #tpu.memory_space<vmem>>, vector<1x1x10x128xbf16>
    %10 = vector.shape_cast %9 : vector<1x1x10x128xbf16> to vector<10x128xbf16>
    %cst = arith.constant 0.000000e+00 : f32
    %11 = vector.broadcast %cst : f32 to vector<8x128xf32>
    %12 = vector.extract_strided_slice %6 {offsets = [0, 0], sizes = [8, 128], strides = [1, 1]} : vector<10x128xbf16> to vector<8x128xbf16>
    %c0_13 = arith.constant 0 : index
    %c0_14 = arith.constant 0 : index
    %c0_15 = arith.constant 0 : index
    %c0_16 = arith.constant 0 : index
    %13 = vector.load %arg5[%c0_13, %c0_14, %c0_15, %c0_16] : memref<3x3x128x128xbf16, #tpu.memory_space<vmem>>, vector<1x1x128x128xbf16>
    %14 = vector.shape_cast %13 : vector<1x1x128x128xbf16> to vector<128x128xbf16>
    %cst_17 = arith.constant dense<0.000000e+00> : vector<8x128xf32>
    %15 = tpu.matmul %12, %14, %cst_17 {dimension_numbers = #tpu.dot_dimension_numbers<[1], [0], [0], [1], [0, 0, 1, 1], [], []>} : vector<8x128xbf16>, vector<128x128xbf16>, vector<8x128xf32> -> vector<8x128xf32>
    %16 = arith.addf %11, %15 : vector<8x128xf32>
    %17 = vector.extract_strided_slice %6 {offsets = [1, 0], sizes = [8, 128], strides = [1, 1]} : vector<10x128xbf16> to vector<8x128xbf16>
    %c0_18 = arith.constant 0 : index
    %c1 = arith.constant 1 : index
    %c0_19 = arith.constant 0 : index
    %c0_20 = arith.constant 0 : index
    %18 = vector.load %arg5[%c0_18, %c1, %c0_19, %c0_20] : memref<3x3x128x128xbf16, #tpu.memory_space<vmem>>, vector<1x1x128x128xbf16>
    %19 = vector.shape_cast %18 : vector<1x1x128x128xbf16> to vector<128x128xbf16>
    %cst_21 = arith.constant dense<0.000000e+00> : vector<8x128xf32>
    %20 = tpu.matmul %17, %19, %cst_21 {dimension_numbers = #tpu.dot_dimension_numbers<[1], [0], [0], [1], [0, 0, 1, 1], [], []>} : vector<8x128xbf16>, vector<128x128xbf16>, vector<8x128xf32> -> vector<8x128xf32>
    %21 = arith.addf %16, %20 : vector<8x128xf32>
    %22 = vector.extract_strided_slice %6 {offsets = [2, 0], sizes = [8, 128], strides = [1, 1]} : vector<10x128xbf16> to vector<8x128xbf16>
    %c0_22 = arith.constant 0 : index
    %c2 = arith.constant 2 : index
    %c0_23 = arith.constant 0 : index
    %c0_24 = arith.constant 0 : index
    %23 = vector.load %arg5[%c0_22, %c2, %c0_23, %c0_24] : memref<3x3x128x128xbf16, #tpu.memory_space<vmem>>, vector<1x1x128x128xbf16>
    %24 = vector.shape_cast %23 : vector<1x1x128x128xbf16> to vector<128x128xbf16>
    %cst_25 = arith.constant dense<0.000000e+00> : vector<8x128xf32>
    %25 = tpu.matmul %22, %24, %cst_25 {dimension_numbers = #tpu.dot_dimension_numbers<[1], [0], [0], [1], [0, 0, 1, 1], [], []>} : vector<8x128xbf16>, vector<128x128xbf16>, vector<8x128xf32> -> vector<8x128xf32>
    %26 = arith.addf %21, %25 : vector<8x128xf32>
    %27 = vector.extract_strided_slice %8 {offsets = [0, 0], sizes = [8, 128], strides = [1, 1]} : vector<10x128xbf16> to vector<8x128xbf16>
    %c1_26 = arith.constant 1 : index
    %c0_27 = arith.constant 0 : index
    %c0_28 = arith.constant 0 : index
    %c0_29 = arith.constant 0 : index
    %28 = vector.load %arg5[%c1_26, %c0_27, %c0_28, %c0_29] : memref<3x3x128x128xbf16, #tpu.memory_space<vmem>>, vector<1x1x128x128xbf16>
    %29 = vector.shape_cast %28 : vector<1x1x128x128xbf16> to vector<128x128xbf16>
    %cst_30 = arith.constant dense<0.000000e+00> : vector<8x128xf32>
    %30 = tpu.matmul %27, %29, %cst_30 {dimension_numbers = #tpu.dot_dimension_numbers<[1], [0], [0], [1], [0, 0, 1, 1], [], []>} : vector<8x128xbf16>, vector<128x128xbf16>, vector<8x128xf32> -> vector<8x128xf32>
    %31 = arith.addf %26, %30 : vector<8x128xf32>
    %32 = vector.extract_strided_slice %8 {offsets = [1, 0], sizes = [8, 128], strides = [1, 1]} : vector<10x128xbf16> to vector<8x128xbf16>
    %c1_31 = arith.constant 1 : index
    %c1_32 = arith.constant 1 : index
    %c0_33 = arith.constant 0 : index
    %c0_34 = arith.constant 0 : index
    %33 = vector.load %arg5[%c1_31, %c1_32, %c0_33, %c0_34] : memref<3x3x128x128xbf16, #tpu.memory_space<vmem>>, vector<1x1x128x128xbf16>
    %34 = vector.shape_cast %33 : vector<1x1x128x128xbf16> to vector<128x128xbf16>
    %cst_35 = arith.constant dense<0.000000e+00> : vector<8x128xf32>
    %35 = tpu.matmul %32, %34, %cst_35 {dimension_numbers = #tpu.dot_dimension_numbers<[1], [0], [0], [1], [0, 0, 1, 1], [], []>} : vector<8x128xbf16>, vector<128x128xbf16>, vector<8x128xf32> -> vector<8x128xf32>
    %36 = arith.addf %31, %35 : vector<8x128xf32>
    %37 = vector.extract_strided_slice %8 {offsets = [2, 0], sizes = [8, 128], strides = [1, 1]} : vector<10x128xbf16> to vector<8x128xbf16>
    %c1_36 = arith.constant 1 : index
    %c2_37 = arith.constant 2 : index
    %c0_38 = arith.constant 0 : index
    %c0_39 = arith.constant 0 : index
    %38 = vector.load %arg5[%c1_36, %c2_37, %c0_38, %c0_39] : memref<3x3x128x128xbf16, #tpu.memory_space<vmem>>, vector<1x1x128x128xbf16>
    %39 = vector.shape_cast %38 : vector<1x1x128x128xbf16> to vector<128x128xbf16>
    %cst_40 = arith.constant dense<0.000000e+00> : vector<8x128xf32>
    %40 = tpu.matmul %37, %39, %cst_40 {dimension_numbers = #tpu.dot_dimension_numbers<[1], [0], [0], [1], [0, 0, 1, 1], [], []>} : vector<8x128xbf16>, vector<128x128xbf16>, vector<8x128xf32> -> vector<8x128xf32>
    %41 = arith.addf %36, %40 : vector<8x128xf32>
    %42 = vector.extract_strided_slice %10 {offsets = [0, 0], sizes = [8, 128], strides = [1, 1]} : vector<10x128xbf16> to vector<8x128xbf16>
    %c2_41 = arith.constant 2 : index
    %c0_42 = arith.constant 0 : index
    %c0_43 = arith.constant 0 : index
    %c0_44 = arith.constant 0 : index
    %43 = vector.load %arg5[%c2_41, %c0_42, %c0_43, %c0_44] : memref<3x3x128x128xbf16, #tpu.memory_space<vmem>>, vector<1x1x128x128xbf16>
    %44 = vector.shape_cast %43 : vector<1x1x128x128xbf16> to vector<128x128xbf16>
    %cst_45 = arith.constant dense<0.000000e+00> : vector<8x128xf32>
    %45 = tpu.matmul %42, %44, %cst_45 {dimension_numbers = #tpu.dot_dimension_numbers<[1], [0], [0], [1], [0, 0, 1, 1], [], []>} : vector<8x128xbf16>, vector<128x128xbf16>, vector<8x128xf32> -> vector<8x128xf32>
    %46 = arith.addf %41, %45 : vector<8x128xf32>
    %47 = vector.extract_strided_slice %10 {offsets = [1, 0], sizes = [8, 128], strides = [1, 1]} : vector<10x128xbf16> to vector<8x128xbf16>
    %c2_46 = arith.constant 2 : index
    %c1_47 = arith.constant 1 : index
    %c0_48 = arith.constant 0 : index
    %c0_49 = arith.constant 0 : index
    %48 = vector.load %arg5[%c2_46, %c1_47, %c0_48, %c0_49] : memref<3x3x128x128xbf16, #tpu.memory_space<vmem>>, vector<1x1x128x128xbf16>
    %49 = vector.shape_cast %48 : vector<1x1x128x128xbf16> to vector<128x128xbf16>
    %cst_50 = arith.constant dense<0.000000e+00> : vector<8x128xf32>
    %50 = tpu.matmul %47, %49, %cst_50 {dimension_numbers = #tpu.dot_dimension_numbers<[1], [0], [0], [1], [0, 0, 1, 1], [], []>} : vector<8x128xbf16>, vector<128x128xbf16>, vector<8x128xf32> -> vector<8x128xf32>
    %51 = arith.addf %46, %50 : vector<8x128xf32>
    %52 = vector.extract_strided_slice %10 {offsets = [2, 0], sizes = [8, 128], strides = [1, 1]} : vector<10x128xbf16> to vector<8x128xbf16>
    %c2_51 = arith.constant 2 : index
    %c2_52 = arith.constant 2 : index
    %c0_53 = arith.constant 0 : index
    %c0_54 = arith.constant 0 : index
    %53 = vector.load %arg5[%c2_51, %c2_52, %c0_53, %c0_54] : memref<3x3x128x128xbf16, #tpu.memory_space<vmem>>, vector<1x1x128x128xbf16>
    %54 = vector.shape_cast %53 : vector<1x1x128x128xbf16> to vector<128x128xbf16>
    %cst_55 = arith.constant dense<0.000000e+00> : vector<8x128xf32>
    %55 = tpu.matmul %52, %54, %cst_55 {dimension_numbers = #tpu.dot_dimension_numbers<[1], [0], [0], [1], [0, 0, 1, 1], [], []>} : vector<8x128xbf16>, vector<128x128xbf16>, vector<8x128xf32> -> vector<8x128xf32>
    %56 = arith.addf %51, %55 : vector<8x128xf32>
    %57 = arith.truncf %56 : vector<8x128xf32> to vector<8x128xbf16>
    %c0_56 = arith.constant 0 : index
    %c0_57 = arith.constant 0 : index
    %c0_58 = arith.constant 0 : index
    %c0_59 = arith.constant 0 : index
    %58 = vector.load %arg6[%c0_56, %c0_57, %c0_58, %c0_59] : memref<1x1x8x128xbf16, #tpu.memory_space<vmem>>, vector<1x1x8x128xbf16>
    %59 = vector.shape_cast %58 : vector<1x1x8x128xbf16> to vector<8x128xbf16>
    %60 = vector.shape_cast %57 : vector<8x128xbf16> to vector<1x1x8x128xbf16>
    tpu.vector_store %arg6[%c0_56, %c0_57, %c0_58, %c0_59], %60 {strides = array<i32>} : memref<1x1x8x128xbf16, #tpu.memory_space<vmem>>, vector<1x1x8x128xbf16>,
    %c0_60 = arith.constant 0 : index
    %c0_61 = arith.constant 0 : index
    %61 = vector.load %arg7[%c0_60, %c0_61] : memref<1x128xf32, #tpu.memory_space<vmem>>, vector<1x128xf32>
    %cst_62 = arith.constant dense<0.000000e+00> : vector<128xf32>
    %62 = vector.multi_reduction <add>, %56, %cst_62 [0] : vector<8x128xf32> to vector<128xf32>
    %63 = vector.shape_cast %62 : vector<128xf32> to vector<1x128xf32>
    %64 = arith.addf %61, %63 : vector<1x128xf32>
    %c0_63 = arith.constant 0 : index
    %c0_64 = arith.constant 0 : index
    %65 = vector.load %arg7[%c0_63, %c0_64] : memref<1x128xf32, #tpu.memory_space<vmem>>, vector<1x128xf32>
    tpu.vector_store %arg7[%c0_63, %c0_64], %64 {strides = array<i32>} : memref<1x128xf32, #tpu.memory_space<vmem>>, vector<1x128xf32>,
    %c0_65 = arith.constant 0 : index
    %c0_66 = arith.constant 0 : index
    %66 = vector.load %arg8[%c0_65, %c0_66] : memref<1x128xf32, #tpu.memory_space<vmem>>, vector<1x128xf32>
    %67 = arith.mulf %56, %56 : vector<8x128xf32>
    %cst_67 = arith.constant dense<0.000000e+00> : vector<128xf32>
    %68 = vector.multi_reduction <add>, %67, %cst_67 [0] : vector<8x128xf32> to vector<128xf32>
    %69 = vector.shape_cast %68 : vector<128xf32> to vector<1x128xf32>
    %70 = arith.addf %66, %69 : vector<1x128xf32>
    %c0_68 = arith.constant 0 : index
    %c0_69 = arith.constant 0 : index
    %71 = vector.load %arg8[%c0_68, %c0_69] : memref<1x128xf32, #tpu.memory_space<vmem>>, vector<1x128xf32>
    tpu.vector_store %arg8[%c0_68, %c0_69], %70 {strides = array<i32>} : memref<1x128xf32, #tpu.memory_space<vmem>>, vector<1x128xf32>,
    return
  }
  func.func @transform_0(%arg0: i32, %arg1: i32) -> (i32, i32, i32, i32) {
    %c0_i32 = arith.constant 0 : i32
    %0 = arith.addi %arg1, %c0_i32 : i32
    %c0_i32_0 = arith.constant 0 : i32
    %c0_i32_1 = arith.constant 0 : i32
    %c0_i32_2 = arith.constant 0 : i32
    return %arg0, %0, %c0_i32_0, %c0_i32_1 : i32, i32, i32, i32
  }
  func.func @transform_1(%arg0: i32, %arg1: i32) -> (i32, i32, i32, i32) {
    %c1_i32 = arith.constant 1 : i32
    %0 = arith.addi %arg1, %c1_i32 : i32
    %c0_i32 = arith.constant 0 : i32
    %c0_i32_0 = arith.constant 0 : i32
    %c0_i32_1 = arith.constant 0 : i32
    return %arg0, %0, %c0_i32, %c0_i32_0 : i32, i32, i32, i32
  }
  func.func @transform_2(%arg0: i32, %arg1: i32) -> (i32, i32, i32, i32) {
    %c2_i32 = arith.constant 2 : i32
    %0 = arith.addi %arg1, %c2_i32 : i32
    %c0_i32 = arith.constant 0 : i32
    %c0_i32_0 = arith.constant 0 : i32
    %c0_i32_1 = arith.constant 0 : i32
    return %arg0, %0, %c0_i32, %c0_i32_0 : i32, i32, i32, i32
  }
  func.func @transform_3(%arg0: i32, %arg1: i32) -> (i32, i32, i32, i32) {
    %c0_i32 = arith.constant 0 : i32
    %c0_i32_0 = arith.constant 0 : i32
    %c0_i32_1 = arith.constant 0 : i32
    %c0_i32_2 = arith.constant 0 : i32
    %c0_i32_3 = arith.constant 0 : i32
    return %c0_i32, %c0_i32_0, %c0_i32_1, %c0_i32_2 : i32, i32, i32, i32
  }
  func.func @transform_4(%arg0: i32, %arg1: i32) -> (i32, i32, i32, i32) {
    %c0_i32 = arith.constant 0 : i32
    %c0_i32_0 = arith.constant 0 : i32
    %c0_i32_1 = arith.constant 0 : i32
    return %arg0, %arg1, %c0_i32, %c0_i32_0 : i32, i32, i32, i32
  }
  func.func @transform_5(%arg0: i32, %arg1: i32) -> (i32, i32) {
    %c0_i32 = arith.constant 0 : i32
    %c0_i32_0 = arith.constant 0 : i32
    %c0_i32_1 = arith.constant 0 : i32
    return %c0_i32, %c0_i32_0 : i32, i32
  }
  func.func @transform_6(%arg0: i32, %arg1: i32) -> (i32, i32) {
    %c0_i32 = arith.constant 0 : i32
    %c0_i32_0 = arith.constant 0 : i32
    %c0_i32_1 = arith.constant 0 : i32
    return %c0_i32, %c0_i32_0 : i32, i32
  }
}

</mosaic_0001>

<llo_original>
// kernel: tpu_custom_call.1
$region0: #{tpu_custom_call.1}
  #allocation0 [shape = 'u32[]', space=smem, size = 0x4, offset = 0x4, fixed_abs, tag = 'smem constant byte address 0x4 - core index']
  #allocation1 [shape = 'u32[144,128]{1,0:T(1,128)}', space=vmem, size = 0x12000, scoped, tag = 'internal scratch']
  %s0 = inlined_call_operand.hbm [shape: bf16[2,10,10,128], index: 0, kind: input, shape index: {}]
  %s1 = inlined_call_operand.hbm [shape: bf16[2,10,10,128], index: 1, kind: input, shape index: {}]
  %s2 = inlined_call_operand.hbm [shape: bf16[2,10,10,128], index: 2, kind: input, shape index: {}]
  %s3 = inlined_call_operand.hbm [shape: bf16[3,3,128,128], index: 3, kind: input, shape index: {}]
  %s4 = inlined_call_operand.hbm [shape: bf16[2,8,8,128], index: 4, kind: output, shape index: {0}]
  %s5 = inlined_call_operand.hbm [shape: f32[1,128], index: 5, kind: output, shape index: {1}]
  %s6 = inlined_call_operand.hbm [shape: f32[1,128], index: 6, kind: output, shape index: {2}]
  %7 = xla_tuple %s4, %s5, %s6
  %s8 = sld [smem:[#allocation0]]
  $region85: #{tpu_custom_call.1} parent=0
    _
  %s10 = ssub.s32 1, %s8
  %s11 = scalar_select 0, %s10, %s8
  $region1: #{tpu_custom_call.1} parent=0
    #allocation2 [shape = 'u8[8192]{0}', space=vmem, size = 0x2000, scoped, tag = 'input window, operand 0']
    #allocation3 [shape = 's32[2]{0}', space=sflag, size = 0x8, scoped, tag = 'scoped memory for tpu_custom_call.1']
    #allocation4 [shape = 's32[2]{0}', space=sflag, size = 0x8, scoped, tag = 'scoped memory for tpu_custom_call.1']
    #allocation5 [shape = 'u8[8192]{0}', space=vmem, size = 0x2000, scoped, tag = 'input window, operand 1']
    #allocation6 [shape = 's32[2]{0}', space=sflag, size = 0x8, scoped, tag = 'scoped memory for tpu_custom_call.1']
    #allocation7 [shape = 'u8[8192]{0}', space=vmem, size = 0x2000, scoped, tag = 'input window, operand 2']
    #allocation8 [shape = 'u8[294912]{0}', space=vmem, size = 0x48000, scoped, tag = 'input window, operand 3, single buffered']
    #allocation9 [shape = 's32[1]{0}', space=sflag, size = 0x4, scoped, tag = 'scoped memory for tpu_custom_call.1']
    #allocation10 [shape = 'u8[4096]{0}', space=vmem, size = 0x1000, scoped, tag = 'output window, operand 0']
    #allocation11 [shape = 'u8[512]{0}', space=vmem, size = 0x400, scoped, tag = 'output window, operand 1, single buffered']
    #allocation12 [shape = 's32[1]{0}', space=sflag, size = 0x4, scoped, tag = 'scoped memory for tpu_custom_call.1']
    #allocation13 [shape = 'u8[512]{0}', space=vmem, size = 0x400, scoped, tag = 'output window, operand 2, single buffered']
    %12 = vsyncpa [#allocation3], 0
    %s13 = scalar_lea.sflag [#allocation3], 1
    %14 = vsyncpa %s13, 0
    %15 = vsyncpa [#allocation6], 0
    %s16 = scalar_lea.sflag [#allocation6], 1
    %17 = vsyncpa %s16, 0
    %18 = vsyncpa [#allocation9], 0
    %19 = vsyncpa [#allocation4], 0
    %s20 = scalar_lea.sflag [#allocation4], 1
    %21 = vsyncpa %s20, 0
    %22 = vsyncpa [#allocation12], 0
    loop: start=0, step=1, limit=18
    $region2: #{tpu_custom_call.1} parent=1 // loop_pre_header
      _
    $region3: #{tpu_custom_call.1} parent=1 // loop_header
      %s24 = sphi 0, %s28
      %p25 = scmp.ge.s32.totalorder %s24, 18
      %s31 = sphi 0, %s43
      %s32 = sphi 0, %s39
      %s33 = sphi 0, %s31
      %s34 = sphi 0, %s32
      %s35 = sphi 0, %s33
      %s36 = sphi 0, %s34
      %s48 = sphi 0, %s50
      %s51 = sphi 0, %s48
      %s52 = sphi 0, %s51
      %s68 = sphi 0, %s52
      %s78 = sphi 0, %s80
      %s81 = sphi 0, %s78
      %s82 = sphi 0, %s81
      %s98 = sphi 0, %s82
      %s108 = sphi 0, %s110
      %s111 = sphi 0, %s108
      %s112 = sphi 0, %s111
      %s128 = sphi 0, %s112
      %s132 = sphi 0, %s132
      %s134 = sphi 0, %s132
      %s135 = sphi 0, %s134
      %s149 = sphi 0, %s135
      %s157 = sphi 0, %s159
      %s160 = sphi 0, %s157
      %s161 = sphi 0, %s160
      %s177 = sphi 0, %s161
      %s181 = sphi 0, %s181
      %s183 = sphi 0, %s181
      %s184 = sphi 0, %s183
      %s198 = sphi 0, %s184
      %s202 = sphi 0, %s202
      %s204 = sphi 0, %s202
      %s205 = sphi 0, %s204
      %s219 = sphi 0, %s205
    $region4: #{tpu_custom_call.1} parent=1 // loop_header_branch
      %27 = sbr.rel (%p25) target = $region8
    $region5: #{tpu_custom_call.1} parent=1 // loop_body
      %s29 = ssub.s32 %s24, 1
      %s30 = ssub.s32 %s24, 2
      %s37 = sadd.s32 1, %s32
      %p38 = scmp.ge.s32.totalorder %s37, 8
      %s39 = scalar_select %p38, 0, %s37
      %s40 = sadd.s32 1, %s31
      %s41 = scalar_select %p38, %s40, %s31
      %p42 = scmp.ge.s32.totalorder %s41, 2
      %s43 = scalar_select %p42, 0, %s41
      %s44 = ssub.s32 %s31, %s43
      %s45 = ssub.s32 %s32, %s39
      %s46 = sor.u32 %s44, %s45
      %p47 = scmp.eq.s32.totalorder %s46, 0
      %s49 = sadd.s32 %s48, 1
      %s50 = scalar_select %p47, %s48, %s49
      %p53 = pneg %p47
      %p54 = scmp.eq.s32.totalorder %s24, 15
      %p55 = por %p53, %p54
      %p56 = scmp.ne.s32.totalorder %s48, %s51
      %p57 = scmp.eq.s32.totalorder %s24, 0
      %p58 = por %p56, %p57
      %p59 = scmp.ne.s32.totalorder %s48, %s51
      %p60 = scmp.eq.s32.totalorder %s29, 15
      %p61 = por %p59, %p60
      %p62 = scmp.ne.s32.totalorder %s51, %s52
      %p63 = scmp.eq.s32.totalorder %s29, 0
      %p64 = por %p62, %p63
      %p65 = scmp.ne.s32.totalorder %s51, %s52
      %p66 = scmp.eq.s32.totalorder %s30, 15
      %p67 = por %p65, %p66
      %p69 = scmp.ne.s32.totalorder %s52, %s68
      %p70 = scmp.eq.s32.totalorder %s30, 0
      %p71 = por %p69, %p70
      %s72 = sadd.s32 %s32, 1
      %s73 = sadd.s32 %s39, 1
      %s74 = ssub.s32 %s31, %s43
      %s75 = ssub.s32 %s72, %s73
      %s76 = sor.u32 %s74, %s75
      %p77 = scmp.eq.s32.totalorder %s76, 0
      %s79 = sadd.s32 %s78, 1
      %s80 = scalar_select %p77, %s78, %s79
      %p83 = pneg %p77
      %p84 = scmp.eq.s32.totalorder %s24, 15
      %p85 = por %p83, %p84
      %p86 = scmp.ne.s32.totalorder %s78, %s81
      %p87 = scmp.eq.s32.totalorder %s24, 0
      %p88 = por %p86, %p87
      %p89 = scmp.ne.s32.totalorder %s78, %s81
      %p90 = scmp.eq.s32.totalorder %s29, 15
      %p91 = por %p89, %p90
      %p92 = scmp.ne.s32.totalorder %s81, %s82
      %p93 = scmp.eq.s32.totalorder %s29, 0
      %p94 = por %p92, %p93
      %p95 = scmp.ne.s32.totalorder %s81, %s82
      %p96 = scmp.eq.s32.totalorder %s30, 15
      %p97 = por %p95, %p96
      %p99 = scmp.ne.s32.totalorder %s82, %s98
      %p100 = scmp.eq.s32.totalorder %s30, 0
      %p101 = por %p99, %p100
      %s102 = sadd.s32 %s32, 2
      %s103 = sadd.s32 %s39, 2
      %s104 = ssub.s32 %s31, %s43
      %s105 = ssub.s32 %s102, %s103
      %s106 = sor.u32 %s104, %s105
      %p107 = scmp.eq.s32.totalorder %s106, 0
      %s109 = sadd.s32 %s108, 1
      %s110 = scalar_select %p107, %s108, %s109
      %p113 = pneg %p107
      %p114 = scmp.eq.s32.totalorder %s24, 15
      %p115 = por %p113, %p114
      %p116 = scmp.ne.s32.totalorder %s108, %s111
      %p117 = scmp.eq.s32.totalorder %s24, 0
      %p118 = por %p116, %p117
      %p119 = scmp.ne.s32.totalorder %s108, %s111
      %p120 = scmp.eq.s32.totalorder %s29, 15
      %p121 = por %p119, %p120
      %p122 = scmp.ne.s32.totalorder %s111, %s112
      %p123 = scmp.eq.s32.totalorder %s29, 0
      %p124 = por %p122, %p123
      %p125 = scmp.ne.s32.totalorder %s111, %s112
      %p126 = scmp.eq.s32.totalorder %s30, 15
      %p127 = por %p125, %p126
      %p129 = scmp.ne.s32.totalorder %s112, %s128
      %p130 = scmp.eq.s32.totalorder %s30, 0
      %p131 = por %p129, %p130
      %s133 = sadd.s32 %s132, 1
      %p136 = scmp.eq.s32.totalorder %s24, 15
      %p137 = scmp.ne.s32.totalorder %s132, %s134
      %p138 = scmp.eq.s32.totalorder %s24, 0
      %p139 = por %p137, %p138
      %p140 = scmp.ne.s32.totalorder %s132, %s134
      %p141 = scmp.eq.s32.totalorder %s29, 15
      %p142 = por %p140, %p141
      %p143 = scmp.ne.s32.totalorder %s134, %s135
      %p144 = scmp.eq.s32.totalorder %s29, 0
      %p145 = por %p143, %p144
      %p146 = scmp.ne.s32.totalorder %s134, %s135
      %p147 = scmp.eq.s32.totalorder %s30, 15
      %p148 = por %p146, %p147
      %p150 = scmp.ne.s32.totalorder %s135, %s149
      %p151 = scmp.eq.s32.totalorder %s30, 0
      %p152 = por %p150, %p151
      %s153 = ssub.s32 %s31, %s43
      %s154 = ssub.s32 %s32, %s39
      %s155 = sor.u32 %s153, %s154
      %p156 = scmp.eq.s32.totalorder %s155, 0
      %s158 = sadd.s32 %s157, 1
      %s159 = scalar_select %p156, %s157, %s158
      %p162 = pneg %p156
      %p163 = scmp.eq.s32.totalorder %s24, 15
      %p164 = por %p162, %p163
      %p165 = scmp.ne.s32.totalorder %s157, %s160
      %p166 = scmp.eq.s32.totalorder %s24, 0
      %p167 = por %p165, %p166
      %p168 = scmp.ne.s32.totalorder %s157, %s160
      %p169 = scmp.eq.s32.totalorder %s29, 15
      %p170 = por %p168, %p169
      %p171 = scmp.ne.s32.totalorder %s160, %s161
      %p172 = scmp.eq.s32.totalorder %s29, 0
      %p173 = por %p171, %p172
      %p174 = scmp.ne.s32.totalorder %s160, %s161
      %p175 = scmp.eq.s32.totalorder %s30, 15
      %p176 = por %p174, %p175
      %p178 = scmp.ne.s32.totalorder %s161, %s177
      %p179 = scmp.eq.s32.totalorder %s30, 0
      %p180 = por %p178, %p179
      %s182 = sadd.s32 %s181, 1
      %p185 = scmp.eq.s32.totalorder %s24, 15
      %p186 = scmp.ne.s32.totalorder %s181, %s183
      %p187 = scmp.eq.s32.totalorder %s24, 0
      %p188 = por %p186, %p187
      %p189 = scmp.ne.s32.totalorder %s181, %s183
      %p190 = scmp.eq.s32.totalorder %s29, 15
      %p191 = por %p189, %p190
      %p192 = scmp.ne.s32.totalorder %s183, %s184
      %p193 = scmp.eq.s32.totalorder %s29, 0
      %p194 = por %p192, %p193
      %p195 = scmp.ne.s32.totalorder %s183, %s184
      %p196 = scmp.eq.s32.totalorder %s30, 15
      %p197 = por %p195, %p196
      %p199 = scmp.ne.s32.totalorder %s184, %s198
      %p200 = scmp.eq.s32.totalorder %s30, 0
      %p201 = por %p199, %p200
      %s203 = sadd.s32 %s202, 1
      %p206 = scmp.eq.s32.totalorder %s24, 15
      %p207 = scmp.ne.s32.totalorder %s202, %s204
      %p208 = scmp.eq.s32.totalorder %s24, 0
      %p209 = por %p207, %p208
      %p210 = scmp.ne.s32.totalorder %s202, %s204
      %p211 = scmp.eq.s32.totalorder %s29, 15
      %p212 = por %p210, %p211
      %p213 = scmp.ne.s32.totalorder %s204, %s205
      %p214 = scmp.eq.s32.totalorder %s29, 0
      %p215 = por %p213, %p214
      %p216 = scmp.ne.s32.totalorder %s204, %s205
      %p217 = scmp.eq.s32.totalorder %s30, 15
      %p218 = por %p216, %p217
      %p220 = scmp.ne.s32.totalorder %s205, %s219
      %p221 = scmp.eq.s32.totalorder %s30, 0
      %p222 = por %p220, %p221
      %p223 = scmp.le.s32.totalorder 1, %s24
      %p224 = scmp.lt.s32.totalorder %s24, 17
      %p225 = pnand %p223, %p224
      %p226 = pneg %p225
      // Predicated region
      $region9: #{tpu_custom_call.1} parent=5 // pred_check
        _
      $region10: #{tpu_custom_call.1} parent=5 // pred_check_branch
        %228 = sbr.rel (%p225) target = $region12
      $region11: #{tpu_custom_call.1} parent=5 // pred_region
        %s229 = ssub.s32 %s24, 1
        // Predicated region
        $region13: #{tpu_custom_call.1} parent=11 // pred_check
          %p230 = pneg %p145
        $region14: #{tpu_custom_call.1} parent=11 // pred_check_branch
          %232 = sbr.rel (%p230) target = $region16
        $region15: #{tpu_custom_call.1} parent=11 // pred_region
          %s234 = ssub.s32 9216, 9216
          %235 = vsyncadd [#allocation9], %s234
          %s236 = sshll.u32 [#allocation8], 4
          %s237 = int_to_ptr.vmem [resolvable:$true] %s236
          %242 = dma.hbm_to_vmem [thread:$0]  %s3, 9216, %s237, [#allocation9], 64, 64, 4
        $region16: #{tpu_custom_call.1} parent=11 // pred_fallthru
          _
      $region12: #{tpu_custom_call.1} parent=5 // pred_fallthru
        _
      %p243 = scmp.lt.s32.totalorder %s24, 16
      // Predicated region
      $region17: #{tpu_custom_call.1} parent=5 // pred_check
        %p244 = pneg %p243
      $region18: #{tpu_custom_call.1} parent=5 // pred_check_branch
        %246 = sbr.rel (%p244) target = $region20
      $region19: #{tpu_custom_call.1} parent=5 // pred_region
        // Predicated region
        $region21: #{tpu_custom_call.1} parent=19 // pred_check
          %p247 = pneg %p58
        $region22: #{tpu_custom_call.1} parent=19 // pred_check_branch
          %249 = sbr.rel (%p247) target = $region24
        $region23: #{tpu_custom_call.1} parent=19 // pred_region
          %s250 = sand.u32 %s48, 1
          %s251 = scalar_lea.sflag [#allocation3], %s250
          %s252 = sand.u32 %s48, 1
          %s253 = smul.addr %s252, 8
          %s254 = scalar_lea.vmem [#allocation2], %s253
          %s256 = ssub.s32 128, 128
          %257 = vsyncadd %s251, %s256
          %s258 = smul.addr %s32, 2
          %s259 = smul.addr %s31, 20
          %s260 = sadd.s32 %s258, %s259
          %s261 = smul.addr %s260, 64
          %s262 = scalar_lea.hbm %s0, %s261
          %s263 = sshll.u32 %s254, 4
          %s264 = int_to_ptr.vmem [resolvable:$true] %s263
          %269 = dma.hbm_to_vmem [thread:$0]  %s262, 128, %s264, %s251, 64, 64, 4
        $region24: #{tpu_custom_call.1} parent=19 // pred_fallthru
          _
        // Predicated region
        $region25: #{tpu_custom_call.1} parent=19 // pred_check
          %p270 = pneg %p88
        $region26: #{tpu_custom_call.1} parent=19 // pred_check_branch
          %272 = sbr.rel (%p270) target = $region28
        $region27: #{tpu_custom_call.1} parent=19 // pred_region
          %s273 = sand.u32 %s24, 1
          %s274 = scalar_lea.sflag [#allocation6], %s273
          %s275 = sand.u32 %s78, 1
          %s276 = smul.addr %s275, 8
          %s277 = scalar_lea.vmem [#allocation5], %s276
          %s278 = sadd.s32 %s32, 1
          %s280 = ssub.s32 128, 128
          %281 = vsyncadd %s274, %s280
          %s282 = smul.addr %s278, 2
          %s283 = smul.addr %s31, 20
          %s284 = sadd.s32 %s282, %s283
          %s285 = smul.addr %s284, 64
          %s286 = scalar_lea.hbm %s1, %s285
          %s287 = sshll.u32 %s277, 4
          %s288 = int_to_ptr.vmem [resolvable:$true] %s287
          %293 = dma.hbm_to_vmem [thread:$0]  %s286, 128, %s288, %s274, 64, 64, 4
        $region28: #{tpu_custom_call.1} parent=19 // pred_fallthru
          _
        // Predicated region
        $region29: #{tpu_custom_call.1} parent=19 // pred_check
          %p294 = pneg %p118
        $region30: #{tpu_custom_call.1} parent=19 // pred_check_branch
          %296 = sbr.rel (%p294) target = $region32
        $region31: #{tpu_custom_call.1} parent=19 // pred_region
          %s297 = sand.u32 %s24, 1
          %s298 = scalar_lea.sflag [#allocation6], %s297
          %s299 = sand.u32 %s108, 1
          %s300 = smul.addr %s299, 8
          %s301 = scalar_lea.vmem [#allocation7], %s300
          %s302 = sadd.s32 %s32, 2
          %s304 = ssub.s32 128, 128
          %305 = vsyncadd %s298, %s304
          %s306 = smul.addr %s302, 2
          %s307 = smul.addr %s31, 20
          %s308 = sadd.s32 %s306, %s307
          %s309 = smul.addr %s308, 64
          %s310 = scalar_lea.hbm %s2, %s309
          %s311 = sshll.u32 %s301, 4
          %s312 = int_to_ptr.vmem [resolvable:$true] %s311
          %317 = dma.hbm_to_vmem [thread:$0]  %s310, 128, %s312, %s298, 64, 64, 4
        $region32: #{tpu_custom_call.1} parent=19 // pred_fallthru
          _
      $region20: #{tpu_custom_call.1} parent=5 // pred_fallthru
        _
      %p318 = scmp.le.s32.totalorder 1, %s24
      %p319 = scmp.lt.s32.totalorder %s24, 17
      %p320 = pnand %p318, %p319
      %p321 = pneg %p320
      // Predicated region
      $region33: #{tpu_custom_call.1} parent=5 // pred_check
        _
      $region34: #{tpu_custom_call.1} parent=5 // pred_check_branch
        %323 = sbr.rel (%p320) target = $region36
      $region35: #{tpu_custom_call.1} parent=5 // pred_region
        %s324 = ssub.s32 %s24, 1
        %s325 = sand.u32 %s51, 1
        %s326 = scalar_lea.sflag [#allocation3], %s325
        %s327 = sand.u32 %s51, 1
        %s328 = smul.addr %s327, 8
        %s329 = scalar_lea.vmem [#allocation2], %s328
        // Predicated region
        $region37: #{tpu_custom_call.1} parent=35 // pred_check
          %p330 = pneg %p64
        $region38: #{tpu_custom_call.1} parent=35 // pred_check_branch
          %332 = sbr.rel (%p330) target = $region40
        $region39: #{tpu_custom_call.1} parent=35 // pred_region
          %333 = dma.done %s326, 128
        $region40: #{tpu_custom_call.1} parent=35 // pred_fallthru
          _
        %s334 = sand.u32 %s29, 1
        %s335 = scalar_lea.sflag [#allocation6], %s334
        %s336 = sand.u32 %s81, 1
        %s337 = smul.addr %s336, 8
        %s338 = scalar_lea.vmem [#allocation5], %s337
        // Predicated region
        $region41: #{tpu_custom_call.1} parent=35 // pred_check
          %p339 = pneg %p94
        $region42: #{tpu_custom_call.1} parent=35 // pred_check_branch
          %341 = sbr.rel (%p339) target = $region44
        $region43: #{tpu_custom_call.1} parent=35 // pred_region
          %342 = dma.done %s335, 128
        $region44: #{tpu_custom_call.1} parent=35 // pred_fallthru
          _
        %s343 = sand.u32 %s29, 1
        %s344 = scalar_lea.sflag [#allocation6], %s343
        %s345 = sand.u32 %s111, 1
        %s346 = smul.addr %s345, 8
        %s347 = scalar_lea.vmem [#allocation7], %s346
        // Predicated region
        $region45: #{tpu_custom_call.1} parent=35 // pred_check
          %p348 = pneg %p124
        $region46: #{tpu_custom_call.1} parent=35 // pred_check_branch
          %350 = sbr.rel (%p348) target = $region48
        $region47: #{tpu_custom_call.1} parent=35 // pred_region
          %351 = dma.done %s344, 128
        $region48: #{tpu_custom_call.1} parent=35 // pred_fallthru
          _
        // Predicated region
        $region49: #{tpu_custom_call.1} parent=35 // pred_check
          %p352 = pneg %p145
        $region50: #{tpu_custom_call.1} parent=35 // pred_check_branch
          %354 = sbr.rel (%p352) target = $region52
        $region51: #{tpu_custom_call.1} parent=35 // pred_region
          %355 = dma.done [#allocation9], 9216
        $region52: #{tpu_custom_call.1} parent=35 // pred_fallthru
          _
        %s356 = sand.u32 %s51, 1
        %s357 = scalar_lea.sflag [#allocation3], %s356
        %s358 = sand.u32 %s51, 1
        %s359 = smul.addr %s358, 8
        %s360 = scalar_lea.vmem [#allocation2], %s359
        %p361 = pneg %p64
        %p362 = pneg %p61
        %s363 = sand.u32 %s29, 1
        %s364 = scalar_lea.sflag [#allocation6], %s363
        %s365 = sand.u32 %s81, 1
        %s366 = smul.addr %s365, 8
        %s367 = scalar_lea.vmem [#allocation5], %s366
        %p368 = pneg %p94
        %p369 = pneg %p91
        %s370 = sand.u32 %s29, 1
        %s371 = scalar_lea.sflag [#allocation6], %s370
        %s372 = sand.u32 %s111, 1
        %s373 = smul.addr %s372, 8
        %s374 = scalar_lea.vmem [#allocation7], %s373
        %p375 = pneg %p124
        %p376 = pneg %p121
        %p377 = pneg %p145
        %p378 = pneg %p142
        %p379 = pneg %p173
        %p380 = pneg %p170
        %s381 = sand.u32 %s160, 1
        %s382 = scalar_lea.sflag [#allocation4], %s381
        %s383 = sand.u32 %s160, 1
        %s384 = smul.addr %s383, 4
        %s385 = scalar_lea.vmem [#allocation10], %s384
        %p386 = pneg %p194
        %p387 = pneg %p191
        %p388 = pneg %p215
        %p389 = pneg %p212
        %s390 = sadd.s32 %s34, 1
        %s391 = sadd.s32 %s34, 2
        %p393 = scmp.eq.s32.totalorder %s33, 0
        %p394 = scmp.eq.s32.totalorder %s34, 0
        %p395 = pnand %p393, %p394
        %p396 = pneg %p395
        // Predicated region
        $region53: #{tpu_custom_call.1} parent=35 // pred_check
          _
        $region54: #{tpu_custom_call.1} parent=35 // pred_check_branch
          %398 = sbr.rel (%p395) target = $region56
        $region55: #{tpu_custom_call.1} parent=35 // pred_region
          %399 = vst [vmem:[#allocation11] sm:$0x1] 0.0
          %400 = vst [vmem:[#allocation13] sm:$0x1] 0.0
        $region56: #{tpu_custom_call.1} parent=35 // pred_fallthru
          _
        %v401 = vld [vmem:[%s329] sm:$0xf]
        %v402 = vld [vmem:[%s329 + $0x4] sm:$0x1]
        %v403 = vld [vmem:[%s338] sm:$0xf]
        %v404 = vld [vmem:[%s338 + $0x4] sm:$0x1]
        %v405 = vld [vmem:[%s347] sm:$0xf]
        %v406 = vld [vmem:[%s347 + $0x4] sm:$0x1]
        %v407 = vld [vmem:[#allocation8] sm:$0xf]
        %v408 = vld [vmem:[#allocation8 + $0x4] sm:$0xf]
        %v409 = vld [vmem:[#allocation8 + $0x8] sm:$0xf]
        %v410 = vld [vmem:[#allocation8 + $0xc] sm:$0xf]
        %v411 = vld [vmem:[#allocation8 + $0x10] sm:$0xf]
        %v412 = vld [vmem:[#allocation8 + $0x14] sm:$0xf]
        %v413 = vld [vmem:[#allocation8 + $0x18] sm:$0xf]
        %v414 = vld [vmem:[#allocation8 + $0x1c] sm:$0xf]
        %v415 = vld [vmem:[#allocation8 + $0x20] sm:$0xf]
        %v416 = vld [vmem:[#allocation8 + $0x24] sm:$0xf]
        %v417 = vld [vmem:[#allocation8 + $0x28] sm:$0xf]
        %v418 = vld [vmem:[#allocation8 + $0x2c] sm:$0xf]
        %v419 = vld [vmem:[#allocation8 + $0x30] sm:$0xf]
        %v420 = vld [vmem:[#allocation8 + $0x34] sm:$0xf]
        %v421 = vld [vmem:[#allocation8 + $0x38] sm:$0xf]
        %v422 = vld [vmem:[#allocation8 + $0x3c] sm:$0xf]
        %s423 = scalar_lea.vmem [#allocation8], 64
        %v424 = vld [vmem:[%s423] sm:$0xf]
        %v425 = vld [vmem:[%s423 + $0x4] sm:$0xf]
        %v426 = vld [vmem:[%s423 + $0x8] sm:$0xf]
        %v427 = vld [vmem:[%s423 + $0xc] sm:$0xf]
        %v428 = vld [vmem:[%s423 + $0x10] sm:$0xf]
        %v429 = vld [vmem:[%s423 + $0x14] sm:$0xf]
        %v430 = vld [vmem:[%s423 + $0x18] sm:$0xf]
        %v431 = vld [vmem:[%s423 + $0x1c] sm:$0xf]
        %v432 = vld [vmem:[%s423 + $0x20] sm:$0xf]
        %v433 = vld [vmem:[%s423 + $0x24] sm:$0xf]
        %v434 = vld [vmem:[%s423 + $0x28] sm:$0xf]
        %v435 = vld [vmem:[%s423 + $0x2c] sm:$0xf]
        %v436 = vld [vmem:[%s423 + $0x30] sm:$0xf]
        %v437 = vld [vmem:[%s423 + $0x34] sm:$0xf]
        %v438 = vld [vmem:[%s423 + $0x38] sm:$0xf]
        %v439 = vld [vmem:[%s423 + $0x3c] sm:$0xf]
        %v442 = vunpack.c.l.b16 %v401
        %v443 = vunpack.c.l.b16 %v402
        %v444 = vpack.c.b16 %v443, %v442
        %v446 = vshrl.u32 %v444, 16
        %v448 = vshll.u32 %v444, 16
        %v450 = vrot.slane %v448, 1
        %v451 = vor.u32 %v446, %v450
        %v469 = vunpack.c.l.b16 %v424
        %v470 = vunpack.c.l.b16 %v425
        %v471 = vunpack.c.l.b16 %v426
        %v472 = vunpack.c.l.b16 %v427
        %v473 = vunpack.c.l.b16 %v428
        %v474 = vunpack.c.l.b16 %v429
        %v475 = vunpack.c.l.b16 %v430
        %v476 = vunpack.c.l.b16 %v431
        %v477 = vunpack.c.l.b16 %v432
        %v478 = vunpack.c.l.b16 %v433
        %v479 = vunpack.c.l.b16 %v434
        %v480 = vunpack.c.l.b16 %v435
        %v481 = vunpack.c.l.b16 %v436
        %v482 = vunpack.c.l.b16 %v437
        %v483 = vunpack.c.l.b16 %v438
        %v484 = vunpack.c.l.b16 %v439
        %v485 = vpack.c.b16 %v470, %v469
        %v486 = vpack.c.b16 %v472, %v471
        %v487 = vpack.c.b16 %v474, %v473
        %v488 = vpack.c.b16 %v476, %v475
        %v489 = vpack.c.b16 %v478, %v477
        %v490 = vpack.c.b16 %v480, %v479
        %v491 = vpack.c.b16 %v482, %v481
        %v492 = vpack.c.b16 %v484, %v483
        %501 = vmatprep.subr.bf16.mxu0 0
        %502 = vmatpush1.bf16.msra.mxu0 %v485
        %503 = vmatprep.subr.bf16.mxu0 0
        %504 = vmatpush1.bf16.msra.mxu0 %v486
        %505 = vmatprep.subr.bf16.mxu0 0
        %506 = vmatpush1.bf16.msra.mxu0 %v487
        %507 = vmatprep.subr.bf16.mxu0 0
        %508 = vmatpush1.bf16.msra.mxu0 %v488
        %509 = vmatprep.subr.bf16.mxu0 0
        %510 = vmatpush1.bf16.msra.mxu0 %v489
        %511 = vmatprep.subr.bf16.mxu0 0
        %512 = vmatpush1.bf16.msra.mxu0 %v490
        %513 = vmatprep.subr.bf16.mxu0 0
        %514 = vmatpush1.bf16.msra.mxu0 %v491
        %515 = vmatprep.subr.bf16.mxu0 0
        %516 = vmatpush1.bf16.msra.mxu0 %v492
        %517 = vmatprep.subr.bf16.mxu0 0
        %518 = vmatpush1.bf16.msra.mxu0 0
        %519 = vmatprep.subr.bf16.mxu0 0
        %520 = vmatpush1.bf16.msra.mxu0 0
        %521 = vmatprep.subr.bf16.mxu0 0
        %522 = vmatpush1.bf16.msra.mxu0 0
        %523 = vmatprep.subr.bf16.mxu0 0
        %524 = vmatpush1.bf16.msra.mxu0 0
        %525 = vmatprep.subr.bf16.mxu0 0
        %526 = vmatpush1.bf16.msra.mxu0 0
        %527 = vmatprep.subr.bf16.mxu0 0
        %528 = vmatpush1.bf16.msra.mxu0 0
        %529 = vmatprep.subr.bf16.mxu0 0
        %530 = vmatpush1.bf16.msra.mxu0 0
        %531 = vmatprep.subr.bf16.mxu0 0
        %532 = vmatpush1.bf16.msra.mxu0 0
        %533 = vmatprep.mubr.bf16.mxu0 0
        %534 = vmatmul.mubr.bf16.gmra.mrb[0].mxu0 %v451
        %v535 = vpop.f32.mrb[0].mxu0
        %v536 = vadd.f32 0.0, %v535
        %v537 = vpop.f32.mrb[0].mxu0
        %v538 = vpop.f32.mrb[0].mxu0
        %v539 = vpop.f32.mrb[0].mxu0
        %540 = vdwg.mxu0
        %v557 = vunpack.c.l.b16 %v407
        %v558 = vunpack.c.l.b16 %v408
        %v559 = vunpack.c.l.b16 %v409
        %v560 = vunpack.c.l.b16 %v410
        %v561 = vunpack.c.l.b16 %v411
        %v562 = vunpack.c.l.b16 %v412
        %v563 = vunpack.c.l.b16 %v413
        %v564 = vunpack.c.l.b16 %v414
        %v565 = vunpack.c.l.b16 %v415
        %v566 = vunpack.c.l.b16 %v416
        %v567 = vunpack.c.l.b16 %v417
        %v568 = vunpack.c.l.b16 %v418
        %v569 = vunpack.c.l.b16 %v419
        %v570 = vunpack.c.l.b16 %v420
        %v571 = vunpack.c.l.b16 %v421
        %v572 = vunpack.c.l.b16 %v422
        %v573 = vpack.c.b16 %v558, %v557
        %v574 = vpack.c.b16 %v560, %v559
        %v575 = vpack.c.b16 %v562, %v561
        %v576 = vpack.c.b16 %v564, %v563
        %v577 = vpack.c.b16 %v566, %v565
        %v578 = vpack.c.b16 %v568, %v567
        %v579 = vpack.c.b16 %v570, %v569
        %v580 = vpack.c.b16 %v572, %v571
        %589 = vmatprep.subr.bf16.mxu0 0
        %590 = vmatpush1.bf16.msra.mxu0 %v573
        %591 = vmatprep.subr.bf16.mxu0 0
        %592 = vmatpush1.bf16.msra.mxu0 %v574
        %593 = vmatprep.subr.bf16.mxu0 0
        %594 = vmatpush1.bf16.msra.mxu0 %v575
        %595 = vmatprep.subr.bf16.mxu0 0
        %596 = vmatpush1.bf16.msra.mxu0 %v576
        %597 = vmatprep.subr.bf16.mxu0 0
        %598 = vmatpush1.bf16.msra.mxu0 %v577
        %599 = vmatprep.subr.bf16.mxu0 0
        %600 = vmatpush1.bf16.msra.mxu0 %v578
        %601 = vmatprep.subr.bf16.mxu0 0
        %602 = vmatpush1.bf16.msra.mxu0 %v579
        %603 = vmatprep.subr.bf16.mxu0 0
        %604 = vmatpush1.bf16.msra.mxu0 %v580
        %605 = vmatprep.subr.bf16.mxu0 0
        %606 = vmatpush1.bf16.msra.mxu0 0
        %607 = vmatprep.subr.bf16.mxu0 0
        %608 = vmatpush1.bf16.msra.mxu0 0
        %609 = vmatprep.subr.bf16.mxu0 0
        %610 = vmatpush1.bf16.msra.mxu0 0
        %611 = vmatprep.subr.bf16.mxu0 0
        %612 = vmatpush1.bf16.msra.mxu0 0
        %613 = vmatprep.subr.bf16.mxu0 0
        %614 = vmatpush1.bf16.msra.mxu0 0
        %615 = vmatprep.subr.bf16.mxu0 0
        %616 = vmatpush1.bf16.msra.mxu0 0
        %617 = vmatprep.subr.bf16.mxu0 0
        %618 = vmatpush1.bf16.msra.mxu0 0
        %619 = vmatprep.subr.bf16.mxu0 0
        %620 = vmatpush1.bf16.msra.mxu0 0
        %621 = vmatprep.mubr.bf16.mxu0 0
        %622 = vmatmul.mubr.bf16.gmra.mrb[0].mxu0 %v401
        %v623 = vpop.f32.mrb[0].mxu0
        %v624 = vadd.f32 %v536, %v623
        %v625 = vpop.f32.mrb[0].mxu0
        %v626 = vpop.f32.mrb[0].mxu0
        %v627 = vpop.f32.mrb[0].mxu0
        %628 = vdwg.mxu0
        %s629 = scalar_lea.vmem [#allocation8], 128
        %v630 = vld [vmem:[%s629] sm:$0xf]
        %v631 = vld [vmem:[%s629 + $0x4] sm:$0xf]
        %v632 = vld [vmem:[%s629 + $0x8] sm:$0xf]
        %v633 = vld [vmem:[%s629 + $0xc] sm:$0xf]
        %v634 = vld [vmem:[%s629 + $0x10] sm:$0xf]
        %v635 = vld [vmem:[%s629 + $0x14] sm:$0xf]
        %v636 = vld [vmem:[%s629 + $0x18] sm:$0xf]
        %v637 = vld [vmem:[%s629 + $0x1c] sm:$0xf]
        %v638 = vld [vmem:[%s629 + $0x20] sm:$0xf]
        %v639 = vld [vmem:[%s629 + $0x24] sm:$0xf]
        %v640 = vld [vmem:[%s629 + $0x28] sm:$0xf]
        %v641 = vld [vmem:[%s629 + $0x2c] sm:$0xf]
        %v642 = vld [vmem:[%s629 + $0x30] sm:$0xf]
        %v643 = vld [vmem:[%s629 + $0x34] sm:$0xf]
        %v644 = vld [vmem:[%s629 + $0x38] sm:$0xf]
        %v645 = vld [vmem:[%s629 + $0x3c] sm:$0xf]
        %v646 = vrot.slane %v444, 1
        %v664 = vunpack.c.l.b16 %v630
        %v665 = vunpack.c.l.b16 %v631
        %v666 = vunpack.c.l.b16 %v632
        %v667 = vunpack.c.l.b16 %v633
        %v668 = vunpack.c.l.b16 %v634
        %v669 = vunpack.c.l.b16 %v635
        %v670 = vunpack.c.l.b16 %v636
        %v671 = vunpack.c.l.b16 %v637
        %v672 = vunpack.c.l.b16 %v638
        %v673 = vunpack.c.l.b16 %v639
        %v674 = vunpack.c.l.b16 %v640
        %v675 = vunpack.c.l.b16 %v641
        %v676 = vunpack.c.l.b16 %v642
        %v677 = vunpack.c.l.b16 %v643
        %v678 = vunpack.c.l.b16 %v644
        %v679 = vunpack.c.l.b16 %v645
        %v680 = vpack.c.b16 %v665, %v664
        %v681 = vpack.c.b16 %v667, %v666
        %v682 = vpack.c.b16 %v669, %v668
        %v683 = vpack.c.b16 %v671, %v670
        %v684 = vpack.c.b16 %v673, %v672
        %v685 = vpack.c.b16 %v675, %v674
        %v686 = vpack.c.b16 %v677, %v676
        %v687 = vpack.c.b16 %v679, %v678
        %696 = vmatprep.subr.bf16.mxu0 0
        %697 = vmatpush1.bf16.msra.mxu0 %v680
        %698 = vmatprep.subr.bf16.mxu0 0
        %699 = vmatpush1.bf16.msra.mxu0 %v681
        %700 = vmatprep.subr.bf16.mxu0 0
        %701 = vmatpush1.bf16.msra.mxu0 %v682
        %702 = vmatprep.subr.bf16.mxu0 0
        %703 = vmatpush1.bf16.msra.mxu0 %v683
        %704 = vmatprep.subr.bf16.mxu0 0
        %705 = vmatpush1.bf16.msra.mxu0 %v684
        %706 = vmatprep.subr.bf16.mxu0 0
        %707 = vmatpush1.bf16.msra.mxu0 %v685
        %708 = vmatprep.subr.bf16.mxu0 0
        %709 = vmatpush1.bf16.msra.mxu0 %v686
        %710 = vmatprep.subr.bf16.mxu0 0
        %711 = vmatpush1.bf16.msra.mxu0 %v687
        %712 = vmatprep.subr.bf16.mxu0 0
        %713 = vmatpush1.bf16.msra.mxu0 0
        %714 = vmatprep.subr.bf16.mxu0 0
        %715 = vmatpush1.bf16.msra.mxu0 0
        %716 = vmatprep.subr.bf16.mxu0 0
        %717 = vmatpush1.bf16.msra.mxu0 0
        %718 = vmatprep.subr.bf16.mxu0 0
        %719 = vmatpush1.bf16.msra.mxu0 0
        %720 = vmatprep.subr.bf16.mxu0 0
        %721 = vmatpush1.bf16.msra.mxu0 0
        %722 = vmatprep.subr.bf16.mxu0 0
        %723 = vmatpush1.bf16.msra.mxu0 0
        %724 = vmatprep.subr.bf16.mxu0 0
        %725 = vmatpush1.bf16.msra.mxu0 0
        %726 = vmatprep.subr.bf16.mxu0 0
        %727 = vmatpush1.bf16.msra.mxu0 0
        %728 = vmatprep.mubr.bf16.mxu0 0
        %729 = vmatmul.mubr.bf16.gmra.mrb[0].mxu0 %v646
        %v730 = vpop.f32.mrb[0].mxu0
        %v731 = vadd.f32 0.0, %v730
        %v732 = vpop.f32.mrb[0].mxu0
        %v733 = vpop.f32.mrb[0].mxu0
        %v734 = vpop.f32.mrb[0].mxu0
        %735 = vdwg.mxu0
        %v736 = vadd.f32 %v624, %v731
        %s737 = scalar_lea.vmem [#allocation8], 192
        %v738 = vld [vmem:[%s737] sm:$0xf]
        %v739 = vld [vmem:[%s737 + $0x4] sm:$0xf]
        %v740 = vld [vmem:[%s737 + $0x8] sm:$0xf]
        %v741 = vld [vmem:[%s737 + $0xc] sm:$0xf]
        %v742 = vld [vmem:[%s737 + $0x10] sm:$0xf]
        %v743 = vld [vmem:[%s737 + $0x14] sm:$0xf]
        %v744 = vld [vmem:[%s737 + $0x18] sm:$0xf]
        %v745 = vld [vmem:[%s737 + $0x1c] sm:$0xf]
        %v746 = vld [vmem:[%s737 + $0x20] sm:$0xf]
        %v747 = vld [vmem:[%s737 + $0x24] sm:$0xf]
        %v748 = vld [vmem:[%s737 + $0x28] sm:$0xf]
        %v749 = vld [vmem:[%s737 + $0x2c] sm:$0xf]
        %v750 = vld [vmem:[%s737 + $0x30] sm:$0xf]
        %v751 = vld [vmem:[%s737 + $0x34] sm:$0xf]
        %v752 = vld [vmem:[%s737 + $0x38] sm:$0xf]
        %v753 = vld [vmem:[%s737 + $0x3c] sm:$0xf]
        %v770 = vunpack.c.l.b16 %v738
        %v771 = vunpack.c.l.b16 %v739
        %v772 = vunpack.c.l.b16 %v740
        %v773 = vunpack.c.l.b16 %v741
        %v774 = vunpack.c.l.b16 %v742
        %v775 = vunpack.c.l.b16 %v743
        %v776 = vunpack.c.l.b16 %v744
        %v777 = vunpack.c.l.b16 %v745
        %v778 = vunpack.c.l.b16 %v746
        %v779 = vunpack.c.l.b16 %v747
        %v780 = vunpack.c.l.b16 %v748
        %v781 = vunpack.c.l.b16 %v749
        %v782 = vunpack.c.l.b16 %v750
        %v783 = vunpack.c.l.b16 %v751
        %v784 = vunpack.c.l.b16 %v752
        %v785 = vunpack.c.l.b16 %v753
        %v786 = vpack.c.b16 %v771, %v770
        %v787 = vpack.c.b16 %v773, %v772
        %v788 = vpack.c.b16 %v775, %v774
        %v789 = vpack.c.b16 %v777, %v776
        %v790 = vpack.c.b16 %v779, %v778
        %v791 = vpack.c.b16 %v781, %v780
        %v792 = vpack.c.b16 %v783, %v782
        %v793 = vpack.c.b16 %v785, %v784
        %802 = vmatprep.subr.bf16.mxu0 0
        %803 = vmatpush1.bf16.msra.mxu0 %v786
        %804 = vmatprep.subr.bf16.mxu0 0
        %805 = vmatpush1.bf16.msra.mxu0 %v787
        %806 = vmatprep.subr.bf16.mxu0 0
        %807 = vmatpush1.bf16.msra.mxu0 %v788
        %808 = vmatprep.subr.bf16.mxu0 0
        %809 = vmatpush1.bf16.msra.mxu0 %v789
        %810 = vmatprep.subr.bf16.mxu0 0
        %811 = vmatpush1.bf16.msra.mxu0 %v790
        %812 = vmatprep.subr.bf16.mxu0 0
        %813 = vmatpush1.bf16.msra.mxu0 %v791
        %814 = vmatprep.subr.bf16.mxu0 0
        %815 = vmatpush1.bf16.msra.mxu0 %v792
        %816 = vmatprep.subr.bf16.mxu0 0
        %817 = vmatpush1.bf16.msra.mxu0 %v793
        %818 = vmatprep.subr.bf16.mxu0 0
        %819 = vmatpush1.bf16.msra.mxu0 0
        %820 = vmatprep.subr.bf16.mxu0 0
        %821 = vmatpush1.bf16.msra.mxu0 0
        %822 = vmatprep.subr.bf16.mxu0 0
        %823 = vmatpush1.bf16.msra.mxu0 0
        %824 = vmatprep.subr.bf16.mxu0 0
        %825 = vmatpush1.bf16.msra.mxu0 0
        %826 = vmatprep.subr.bf16.mxu0 0
        %827 = vmatpush1.bf16.msra.mxu0 0
        %828 = vmatprep.subr.bf16.mxu0 0
        %829 = vmatpush1.bf16.msra.mxu0 0
        %830 = vmatprep.subr.bf16.mxu0 0
        %831 = vmatpush1.bf16.msra.mxu0 0
        %832 = vmatprep.subr.bf16.mxu0 0
        %833 = vmatpush1.bf16.msra.mxu0 0
        %834 = vmatprep.mubr.bf16.mxu0 0
        %835 = vmatmul.mubr.bf16.gmra.mrb[0].mxu0 %v403
        %v836 = vpop.f32.mrb[0].mxu0
        %v837 = vadd.f32 0.0, %v836
        %v838 = vpop.f32.mrb[0].mxu0
        %v839 = vpop.f32.mrb[0].mxu0
        %v840 = vpop.f32.mrb[0].mxu0
        %841 = vdwg.mxu0
        %v842 = vadd.f32 %v736, %v837
        %s843 = scalar_lea.vmem [#allocation8], 256
        %v844 = vld [vmem:[%s843] sm:$0xf]
        %v845 = vld [vmem:[%s843 + $0x4] sm:$0xf]
        %v846 = vld [vmem:[%s843 + $0x8] sm:$0xf]
        %v847 = vld [vmem:[%s843 + $0xc] sm:$0xf]
        %v848 = vld [vmem:[%s843 + $0x10] sm:$0xf]
        %v849 = vld [vmem:[%s843 + $0x14] sm:$0xf]
        %v850 = vld [vmem:[%s843 + $0x18] sm:$0xf]
        %v851 = vld [vmem:[%s843 + $0x1c] sm:$0xf]
        %v852 = vld [vmem:[%s843 + $0x20] sm:$0xf]
        %v853 = vld [vmem:[%s843 + $0x24] sm:$0xf]
        %v854 = vld [vmem:[%s843 + $0x28] sm:$0xf]
        %v855 = vld [vmem:[%s843 + $0x2c] sm:$0xf]
        %v856 = vld [vmem:[%s843 + $0x30] sm:$0xf]
        %v857 = vld [vmem:[%s843 + $0x34] sm:$0xf]
        %v858 = vld [vmem:[%s843 + $0x38] sm:$0xf]
        %v859 = vld [vmem:[%s843 + $0x3c] sm:$0xf]
        %v862 = vunpack.c.l.b16 %v403
        %v863 = vunpack.c.l.b16 %v404
        %v864 = vpack.c.b16 %v863, %v862
        %v866 = vshrl.u32 %v864, 16
        %v868 = vshll.u32 %v864, 16
        %v870 = vrot.slane %v868, 1
        %v871 = vor.u32 %v866, %v870
        %v889 = vunpack.c.l.b16 %v844
        %v890 = vunpack.c.l.b16 %v845
        %v891 = vunpack.c.l.b16 %v846
        %v892 = vunpack.c.l.b16 %v847
        %v893 = vunpack.c.l.b16 %v848
        %v894 = vunpack.c.l.b16 %v849
        %v895 = vunpack.c.l.b16 %v850
        %v896 = vunpack.c.l.b16 %v851
        %v897 = vunpack.c.l.b16 %v852
        %v898 = vunpack.c.l.b16 %v853
        %v899 = vunpack.c.l.b16 %v854
        %v900 = vunpack.c.l.b16 %v855
        %v901 = vunpack.c.l.b16 %v856
        %v902 = vunpack.c.l.b16 %v857
        %v903 = vunpack.c.l.b16 %v858
        %v904 = vunpack.c.l.b16 %v859
        %v905 = vpack.c.b16 %v890, %v889
        %v906 = vpack.c.b16 %v892, %v891
        %v907 = vpack.c.b16 %v894, %v893
        %v908 = vpack.c.b16 %v896, %v895
        %v909 = vpack.c.b16 %v898, %v897
        %v910 = vpack.c.b16 %v900, %v899
        %v911 = vpack.c.b16 %v902, %v901
        %v912 = vpack.c.b16 %v904, %v903
        %921 = vmatprep.subr.bf16.mxu0 0
        %922 = vmatpush1.bf16.msra.mxu0 %v905
        %923 = vmatprep.subr.bf16.mxu0 0
        %924 = vmatpush1.bf16.msra.mxu0 %v906
        %925 = vmatprep.subr.bf16.mxu0 0
        %926 = vmatpush1.bf16.msra.mxu0 %v907
        %927 = vmatprep.subr.bf16.mxu0 0
        %928 = vmatpush1.bf16.msra.mxu0 %v908
        %929 = vmatprep.subr.bf16.mxu0 0
        %930 = vmatpush1.bf16.msra.mxu0 %v909
        %931 = vmatprep.subr.bf16.mxu0 0
        %932 = vmatpush1.bf16.msra.mxu0 %v910
        %933 = vmatprep.subr.bf16.mxu0 0
        %934 = vmatpush1.bf16.msra.mxu0 %v911
        %935 = vmatprep.subr.bf16.mxu0 0
        %936 = vmatpush1.bf16.msra.mxu0 %v912
        %937 = vmatprep.subr.bf16.mxu0 0
        %938 = vmatpush1.bf16.msra.mxu0 0
        %939 = vmatprep.subr.bf16.mxu0 0
        %940 = vmatpush1.bf16.msra.mxu0 0
        %941 = vmatprep.subr.bf16.mxu0 0
        %942 = vmatpush1.bf16.msra.mxu0 0
        %943 = vmatprep.subr.bf16.mxu0 0
        %944 = vmatpush1.bf16.msra.mxu0 0
        %945 = vmatprep.subr.bf16.mxu0 0
        %946 = vmatpush1.bf16.msra.mxu0 0
        %947 = vmatprep.subr.bf16.mxu0 0
        %948 = vmatpush1.bf16.msra.mxu0 0
        %949 = vmatprep.subr.bf16.mxu0 0
        %950 = vmatpush1.bf16.msra.mxu0 0
        %951 = vmatprep.subr.bf16.mxu0 0
        %952 = vmatpush1.bf16.msra.mxu0 0
        %953 = vmatprep.mubr.bf16.mxu0 0
        %954 = vmatmul.mubr.bf16.gmra.mrb[0].mxu0 %v871
        %v955 = vpop.f32.mrb[0].mxu0
        %v956 = vadd.f32 0.0, %v955
        %v957 = vpop.f32.mrb[0].mxu0
        %v958 = vpop.f32.mrb[0].mxu0
        %v959 = vpop.f32.mrb[0].mxu0
        %960 = vdwg.mxu0
        %v961 = vadd.f32 %v842, %v956
        %s962 = scalar_lea.vmem [#allocation8], 320
        %v963 = vld [vmem:[%s962] sm:$0xf]
        %v964 = vld [vmem:[%s962 + $0x4] sm:$0xf]
        %v965 = vld [vmem:[%s962 + $0x8] sm:$0xf]
        %v966 = vld [vmem:[%s962 + $0xc] sm:$0xf]
        %v967 = vld [vmem:[%s962 + $0x10] sm:$0xf]
        %v968 = vld [vmem:[%s962 + $0x14] sm:$0xf]
        %v969 = vld [vmem:[%s962 + $0x18] sm:$0xf]
        %v970 = vld [vmem:[%s962 + $0x1c] sm:$0xf]
        %v971 = vld [vmem:[%s962 + $0x20] sm:$0xf]
        %v972 = vld [vmem:[%s962 + $0x24] sm:$0xf]
        %v973 = vld [vmem:[%s962 + $0x28] sm:$0xf]
        %v974 = vld [vmem:[%s962 + $0x2c] sm:$0xf]
        %v975 = vld [vmem:[%s962 + $0x30] sm:$0xf]
        %v976 = vld [vmem:[%s962 + $0x34] sm:$0xf]
        %v977 = vld [vmem:[%s962 + $0x38] sm:$0xf]
        %v978 = vld [vmem:[%s962 + $0x3c] sm:$0xf]
        %v979 = vrot.slane %v864, 1
        %v997 = vunpack.c.l.b16 %v963
        %v998 = vunpack.c.l.b16 %v964
        %v999 = vunpack.c.l.b16 %v965
        %v1000 = vunpack.c.l.b16 %v966
        %v1001 = vunpack.c.l.b16 %v967
        %v1002 = vunpack.c.l.b16 %v968
        %v1003 = vunpack.c.l.b16 %v969
        %v1004 = vunpack.c.l.b16 %v970
        %v1005 = vunpack.c.l.b16 %v971
        %v1006 = vunpack.c.l.b16 %v972
        %v1007 = vunpack.c.l.b16 %v973
        %v1008 = vunpack.c.l.b16 %v974
        %v1009 = vunpack.c.l.b16 %v975
        %v1010 = vunpack.c.l.b16 %v976
        %v1011 = vunpack.c.l.b16 %v977
        %v1012 = vunpack.c.l.b16 %v978
        %v1013 = vpack.c.b16 %v998, %v997
        %v1014 = vpack.c.b16 %v1000, %v999
        %v1015 = vpack.c.b16 %v1002, %v1001
        %v1016 = vpack.c.b16 %v1004, %v1003
        %v1017 = vpack.c.b16 %v1006, %v1005
        %v1018 = vpack.c.b16 %v1008, %v1007
        %v1019 = vpack.c.b16 %v1010, %v1009
        %v1020 = vpack.c.b16 %v1012, %v1011
        %1029 = vmatprep.subr.bf16.mxu0 0
        %1030 = vmatpush1.bf16.msra.mxu0 %v1013
        %1031 = vmatprep.subr.bf16.mxu0 0
        %1032 = vmatpush1.bf16.msra.mxu0 %v1014
        %1033 = vmatprep.subr.bf16.mxu0 0
        %1034 = vmatpush1.bf16.msra.mxu0 %v1015
        %1035 = vmatprep.subr.bf16.mxu0 0
        %1036 = vmatpush1.bf16.msra.mxu0 %v1016
        %1037 = vmatprep.subr.bf16.mxu0 0
        %1038 = vmatpush1.bf16.msra.mxu0 %v1017
        %1039 = vmatprep.subr.bf16.mxu0 0
        %1040 = vmatpush1.bf16.msra.mxu0 %v1018
        %1041 = vmatprep.subr.bf16.mxu0 0
        %1042 = vmatpush1.bf16.msra.mxu0 %v1019
        %1043 = vmatprep.subr.bf16.mxu0 0
        %1044 = vmatpush1.bf16.msra.mxu0 %v1020
        %1045 = vmatprep.subr.bf16.mxu0 0
        %1046 = vmatpush1.bf16.msra.mxu0 0
        %1047 = vmatprep.subr.bf16.mxu0 0
        %1048 = vmatpush1.bf16.msra.mxu0 0
        %1049 = vmatprep.subr.bf16.mxu0 0
        %1050 = vmatpush1.bf16.msra.mxu0 0
        %1051 = vmatprep.subr.bf16.mxu0 0
        %1052 = vmatpush1.bf16.msra.mxu0 0
        %1053 = vmatprep.subr.bf16.mxu0 0
        %1054 = vmatpush1.bf16.msra.mxu0 0
        %1055 = vmatprep.subr.bf16.mxu0 0
        %1056 = vmatpush1.bf16.msra.mxu0 0
        %1057 = vmatprep.subr.bf16.mxu0 0
        %1058 = vmatpush1.bf16.msra.mxu0 0
        %1059 = vmatprep.subr.bf16.mxu0 0
        %1060 = vmatpush1.bf16.msra.mxu0 0
        %1061 = vmatprep.mubr.bf16.mxu0 0
        %1062 = vmatmul.mubr.bf16.gmra.mrb[0].mxu0 %v979
        %v1063 = vpop.f32.mrb[0].mxu0
        %v1064 = vadd.f32 0.0, %v1063
        %v1065 = vpop.f32.mrb[0].mxu0
        %v1066 = vpop.f32.mrb[0].mxu0
        %v1067 = vpop.f32.mrb[0].mxu0
        %1068 = vdwg.mxu0
        %v1069 = vadd.f32 %v961, %v1064
        %s1070 = scalar_lea.vmem [#allocation8], 384
        %v1071 = vld [vmem:[%s1070] sm:$0xf]
        %v1072 = vld [vmem:[%s1070 + $0x4] sm:$0xf]
        %v1073 = vld [vmem:[%s1070 + $0x8] sm:$0xf]
        %v1074 = vld [vmem:[%s1070 + $0xc] sm:$0xf]
        %v1075 = vld [vmem:[%s1070 + $0x10] sm:$0xf]
        %v1076 = vld [vmem:[%s1070 + $0x14] sm:$0xf]
        %v1077 = vld [vmem:[%s1070 + $0x18] sm:$0xf]
        %v1078 = vld [vmem:[%s1070 + $0x1c] sm:$0xf]
        %v1079 = vld [vmem:[%s1070 + $0x20] sm:$0xf]
        %v1080 = vld [vmem:[%s1070 + $0x24] sm:$0xf]
        %v1081 = vld [vmem:[%s1070 + $0x28] sm:$0xf]
        %v1082 = vld [vmem:[%s1070 + $0x2c] sm:$0xf]
        %v1083 = vld [vmem:[%s1070 + $0x30] sm:$0xf]
        %v1084 = vld [vmem:[%s1070 + $0x34] sm:$0xf]
        %v1085 = vld [vmem:[%s1070 + $0x38] sm:$0xf]
        %v1086 = vld [vmem:[%s1070 + $0x3c] sm:$0xf]
        %v1103 = vunpack.c.l.b16 %v1071
        %v1104 = vunpack.c.l.b16 %v1072
        %v1105 = vunpack.c.l.b16 %v1073
        %v1106 = vunpack.c.l.b16 %v1074
        %v1107 = vunpack.c.l.b16 %v1075
        %v1108 = vunpack.c.l.b16 %v1076
        %v1109 = vunpack.c.l.b16 %v1077
        %v1110 = vunpack.c.l.b16 %v1078
        %v1111 = vunpack.c.l.b16 %v1079
        %v1112 = vunpack.c.l.b16 %v1080
        %v1113 = vunpack.c.l.b16 %v1081
        %v1114 = vunpack.c.l.b16 %v1082
        %v1115 = vunpack.c.l.b16 %v1083
        %v1116 = vunpack.c.l.b16 %v1084
        %v1117 = vunpack.c.l.b16 %v1085
        %v1118 = vunpack.c.l.b16 %v1086
        %v1119 = vpack.c.b16 %v1104, %v1103
        %v1120 = vpack.c.b16 %v1106, %v1105
        %v1121 = vpack.c.b16 %v1108, %v1107
        %v1122 = vpack.c.b16 %v1110, %v1109
        %v1123 = vpack.c.b16 %v1112, %v1111
        %v1124 = vpack.c.b16 %v1114, %v1113
        %v1125 = vpack.c.b16 %v1116, %v1115
        %v1126 = vpack.c.b16 %v1118, %v1117
        %1135 = vmatprep.subr.bf16.mxu0 0
        %1136 = vmatpush1.bf16.msra.mxu0 %v1119
        %1137 = vmatprep.subr.bf16.mxu0 0
        %1138 = vmatpush1.bf16.msra.mxu0 %v1120
        %1139 = vmatprep.subr.bf16.mxu0 0
        %1140 = vmatpush1.bf16.msra.mxu0 %v1121
        %1141 = vmatprep.subr.bf16.mxu0 0
        %1142 = vmatpush1.bf16.msra.mxu0 %v1122
        %1143 = vmatprep.subr.bf16.mxu0 0
        %1144 = vmatpush1.bf16.msra.mxu0 %v1123
        %1145 = vmatprep.subr.bf16.mxu0 0
        %1146 = vmatpush1.bf16.msra.mxu0 %v1124
        %1147 = vmatprep.subr.bf16.mxu0 0
        %1148 = vmatpush1.bf16.msra.mxu0 %v1125
        %1149 = vmatprep.subr.bf16.mxu0 0
        %1150 = vmatpush1.bf16.msra.mxu0 %v1126
        %1151 = vmatprep.subr.bf16.mxu0 0
        %1152 = vmatpush1.bf16.msra.mxu0 0
        %1153 = vmatprep.subr.bf16.mxu0 0
        %1154 = vmatpush1.bf16.msra.mxu0 0
        %1155 = vmatprep.subr.bf16.mxu0 0
        %1156 = vmatpush1.bf16.msra.mxu0 0
        %1157 = vmatprep.subr.bf16.mxu0 0
        %1158 = vmatpush1.bf16.msra.mxu0 0
        %1159 = vmatprep.subr.bf16.mxu0 0
        %1160 = vmatpush1.bf16.msra.mxu0 0
        %1161 = vmatprep.subr.bf16.mxu0 0
        %1162 = vmatpush1.bf16.msra.mxu0 0
        %1163 = vmatprep.subr.bf16.mxu0 0
        %1164 = vmatpush1.bf16.msra.mxu0 0
        %1165 = vmatprep.subr.bf16.mxu0 0
        %1166 = vmatpush1.bf16.msra.mxu0 0
        %1167 = vmatprep.mubr.bf16.mxu0 0
        %1168 = vmatmul.mubr.bf16.gmra.mrb[0].mxu0 %v405
        %v1169 = vpop.f32.mrb[0].mxu0
        %v1170 = vadd.f32 0.0, %v1169
        %v1171 = vpop.f32.mrb[0].mxu0
        %v1172 = vpop.f32.mrb[0].mxu0
        %v1173 = vpop.f32.mrb[0].mxu0
        %1174 = vdwg.mxu0
        %v1175 = vadd.f32 %v1069, %v1170
        %s1176 = scalar_lea.vmem [#allocation8], 448
        %v1177 = vld [vmem:[%s1176] sm:$0xf]
        %v1178 = vld [vmem:[%s1176 + $0x4] sm:$0xf]
        %v1179 = vld [vmem:[%s1176 + $0x8] sm:$0xf]
        %v1180 = vld [vmem:[%s1176 + $0xc] sm:$0xf]
        %v1181 = vld [vmem:[%s1176 + $0x10] sm:$0xf]
        %v1182 = vld [vmem:[%s1176 + $0x14] sm:$0xf]
        %v1183 = vld [vmem:[%s1176 + $0x18] sm:$0xf]
        %v1184 = vld [vmem:[%s1176 + $0x1c] sm:$0xf]
        %v1185 = vld [vmem:[%s1176 + $0x20] sm:$0xf]
        %v1186 = vld [vmem:[%s1176 + $0x24] sm:$0xf]
        %v1187 = vld [vmem:[%s1176 + $0x28] sm:$0xf]
        %v1188 = vld [vmem:[%s1176 + $0x2c] sm:$0xf]
        %v1189 = vld [vmem:[%s1176 + $0x30] sm:$0xf]
        %v1190 = vld [vmem:[%s1176 + $0x34] sm:$0xf]
        %v1191 = vld [vmem:[%s1176 + $0x38] sm:$0xf]
        %v1192 = vld [vmem:[%s1176 + $0x3c] sm:$0xf]
        %v1195 = vunpack.c.l.b16 %v405
        %v1196 = vunpack.c.l.b16 %v406
        %v1197 = vpack.c.b16 %v1196, %v1195
        %v1199 = vshrl.u32 %v1197, 16
        %v1201 = vshll.u32 %v1197, 16
        %v1203 = vrot.slane %v1201, 1
        %v1204 = vor.u32 %v1199, %v1203
        %v1222 = vunpack.c.l.b16 %v1177
        %v1223 = vunpack.c.l.b16 %v1178
        %v1224 = vunpack.c.l.b16 %v1179
        %v1225 = vunpack.c.l.b16 %v1180
        %v1226 = vunpack.c.l.b16 %v1181
        %v1227 = vunpack.c.l.b16 %v1182
        %v1228 = vunpack.c.l.b16 %v1183
        %v1229 = vunpack.c.l.b16 %v1184
        %v1230 = vunpack.c.l.b16 %v1185
        %v1231 = vunpack.c.l.b16 %v1186
        %v1232 = vunpack.c.l.b16 %v1187
        %v1233 = vunpack.c.l.b16 %v1188
        %v1234 = vunpack.c.l.b16 %v1189
        %v1235 = vunpack.c.l.b16 %v1190
        %v1236 = vunpack.c.l.b16 %v1191
        %v1237 = vunpack.c.l.b16 %v1192
        %v1238 = vpack.c.b16 %v1223, %v1222
        %v1239 = vpack.c.b16 %v1225, %v1224
        %v1240 = vpack.c.b16 %v1227, %v1226
        %v1241 = vpack.c.b16 %v1229, %v1228
        %v1242 = vpack.c.b16 %v1231, %v1230
        %v1243 = vpack.c.b16 %v1233, %v1232
        %v1244 = vpack.c.b16 %v1235, %v1234
        %v1245 = vpack.c.b16 %v1237, %v1236
        %1254 = vmatprep.subr.bf16.mxu0 0
        %1255 = vmatpush1.bf16.msra.mxu0 %v1238
        %1256 = vmatprep.subr.bf16.mxu0 0
        %1257 = vmatpush1.bf16.msra.mxu0 %v1239
        %1258 = vmatprep.subr.bf16.mxu0 0
        %1259 = vmatpush1.bf16.msra.mxu0 %v1240
        %1260 = vmatprep.subr.bf16.mxu0 0
        %1261 = vmatpush1.bf16.msra.mxu0 %v1241
        %1262 = vmatprep.subr.bf16.mxu0 0
        %1263 = vmatpush1.bf16.msra.mxu0 %v1242
        %1264 = vmatprep.subr.bf16.mxu0 0
        %1265 = vmatpush1.bf16.msra.mxu0 %v1243
        %1266 = vmatprep.subr.bf16.mxu0 0
        %1267 = vmatpush1.bf16.msra.mxu0 %v1244
        %1268 = vmatprep.subr.bf16.mxu0 0
        %1269 = vmatpush1.bf16.msra.mxu0 %v1245
        %1270 = vmatprep.subr.bf16.mxu0 0
        %1271 = vmatpush1.bf16.msra.mxu0 0
        %1272 = vmatprep.subr.bf16.mxu0 0
        %1273 = vmatpush1.bf16.msra.mxu0 0
        %1274 = vmatprep.subr.bf16.mxu0 0
        %1275 = vmatpush1.bf16.msra.mxu0 0
        %1276 = vmatprep.subr.bf16.mxu0 0
        %1277 = vmatpush1.bf16.msra.mxu0 0
        %1278 = vmatprep.subr.bf16.mxu0 0
        %1279 = vmatpush1.bf16.msra.mxu0 0
        %1280 = vmatprep.subr.bf16.mxu0 0
        %1281 = vmatpush1.bf16.msra.mxu0 0
        %1282 = vmatprep.subr.bf16.mxu0 0
        %1283 = vmatpush1.bf16.msra.mxu0 0
        %1284 = vmatprep.subr.bf16.mxu0 0
        %1285 = vmatpush1.bf16.msra.mxu0 0
        %1286 = vmatprep.mubr.bf16.mxu0 0
        %1287 = vmatmul.mubr.bf16.gmra.mrb[0].mxu0 %v1204
        %v1288 = vpop.f32.mrb[0].mxu0
        %v1289 = vadd.f32 0.0, %v1288
        %v1290 = vpop.f32.mrb[0].mxu0
        %v1291 = vpop.f32.mrb[0].mxu0
        %v1292 = vpop.f32.mrb[0].mxu0
        %1293 = vdwg.mxu0
        %v1294 = vadd.f32 %v1175, %v1289
        %s1295 = scalar_lea.vmem [#allocation8], 512
        %v1296 = vld [vmem:[%s1295] sm:$0xf]
        %v1297 = vld [vmem:[%s1295 + $0x4] sm:$0xf]
        %v1298 = vld [vmem:[%s1295 + $0x8] sm:$0xf]
        %v1299 = vld [vmem:[%s1295 + $0xc] sm:$0xf]
        %v1300 = vld [vmem:[%s1295 + $0x10] sm:$0xf]
        %v1301 = vld [vmem:[%s1295 + $0x14] sm:$0xf]
        %v1302 = vld [vmem:[%s1295 + $0x18] sm:$0xf]
        %v1303 = vld [vmem:[%s1295 + $0x1c] sm:$0xf]
        %v1304 = vld [vmem:[%s1295 + $0x20] sm:$0xf]
        %v1305 = vld [vmem:[%s1295 + $0x24] sm:$0xf]
        %v1306 = vld [vmem:[%s1295 + $0x28] sm:$0xf]
        %v1307 = vld [vmem:[%s1295 + $0x2c] sm:$0xf]
        %v1308 = vld [vmem:[%s1295 + $0x30] sm:$0xf]
        %v1309 = vld [vmem:[%s1295 + $0x34] sm:$0xf]
        %v1310 = vld [vmem:[%s1295 + $0x38] sm:$0xf]
        %v1311 = vld [vmem:[%s1295 + $0x3c] sm:$0xf]
        %v1312 = vrot.slane %v1197, 1
        %v1330 = vunpack.c.l.b16 %v1296
        %v1331 = vunpack.c.l.b16 %v1297
        %v1332 = vunpack.c.l.b16 %v1298
        %v1333 = vunpack.c.l.b16 %v1299
        %v1334 = vunpack.c.l.b16 %v1300
        %v1335 = vunpack.c.l.b16 %v1301
        %v1336 = vunpack.c.l.b16 %v1302
        %v1337 = vunpack.c.l.b16 %v1303
        %v1338 = vunpack.c.l.b16 %v1304
        %v1339 = vunpack.c.l.b16 %v1305
        %v1340 = vunpack.c.l.b16 %v1306
        %v1341 = vunpack.c.l.b16 %v1307
        %v1342 = vunpack.c.l.b16 %v1308
        %v1343 = vunpack.c.l.b16 %v1309
        %v1344 = vunpack.c.l.b16 %v1310
        %v1345 = vunpack.c.l.b16 %v1311
        %v1346 = vpack.c.b16 %v1331, %v1330
        %v1347 = vpack.c.b16 %v1333, %v1332
        %v1348 = vpack.c.b16 %v1335, %v1334
        %v1349 = vpack.c.b16 %v1337, %v1336
        %v1350 = vpack.c.b16 %v1339, %v1338
        %v1351 = vpack.c.b16 %v1341, %v1340
        %v1352 = vpack.c.b16 %v1343, %v1342
        %v1353 = vpack.c.b16 %v1345, %v1344
        %1362 = vmatprep.subr.bf16.mxu0 0
        %1363 = vmatpush1.bf16.msra.mxu0 %v1346
        %1364 = vmatprep.subr.bf16.mxu0 0
        %1365 = vmatpush1.bf16.msra.mxu0 %v1347
        %1366 = vmatprep.subr.bf16.mxu0 0
        %1367 = vmatpush1.bf16.msra.mxu0 %v1348
        %1368 = vmatprep.subr.bf16.mxu0 0
        %1369 = vmatpush1.bf16.msra.mxu0 %v1349
        %1370 = vmatprep.subr.bf16.mxu0 0
        %1371 = vmatpush1.bf16.msra.mxu0 %v1350
        %1372 = vmatprep.subr.bf16.mxu0 0
        %1373 = vmatpush1.bf16.msra.mxu0 %v1351
        %1374 = vmatprep.subr.bf16.mxu0 0
        %1375 = vmatpush1.bf16.msra.mxu0 %v1352
        %1376 = vmatprep.subr.bf16.mxu0 0
        %1377 = vmatpush1.bf16.msra.mxu0 %v1353
        %1378 = vmatprep.subr.bf16.mxu0 0
        %1379 = vmatpush1.bf16.msra.mxu0 0
        %1380 = vmatprep.subr.bf16.mxu0 0
        %1381 = vmatpush1.bf16.msra.mxu0 0
        %1382 = vmatprep.subr.bf16.mxu0 0
        %1383 = vmatpush1.bf16.msra.mxu0 0
        %1384 = vmatprep.subr.bf16.mxu0 0
        %1385 = vmatpush1.bf16.msra.mxu0 0
        %1386 = vmatprep.subr.bf16.mxu0 0
        %1387 = vmatpush1.bf16.msra.mxu0 0
        %1388 = vmatprep.subr.bf16.mxu0 0
        %1389 = vmatpush1.bf16.msra.mxu0 0
        %1390 = vmatprep.subr.bf16.mxu0 0
        %1391 = vmatpush1.bf16.msra.mxu0 0
        %1392 = vmatprep.subr.bf16.mxu0 0
        %1393 = vmatpush1.bf16.msra.mxu0 0
        %1394 = vmatprep.mubr.bf16.mxu0 0
        %1395 = vmatmul.mubr.bf16.gmra.mrb[0].mxu0 %v1312
        %v1396 = vpop.f32.mrb[0].mxu0
        %v1397 = vadd.f32 0.0, %v1396
        %v1398 = vpop.f32.mrb[0].mxu0
        %v1399 = vpop.f32.mrb[0].mxu0
        %v1400 = vpop.f32.mrb[0].mxu0
        %1401 = vdwg.mxu0
        %v1402 = vadd.f32 %v1294, %v1397
        %v1403 = vpack.c.bf16 %v1402, %v1402
        %1404 = vst [vmem:[%s385] sm:$0xf] %v1403
        %v1405 = vld [vmem:[#allocation11] sm:$0x1]
        %v1406 = vrot.slane %v1402, 4
        %v1407 = vadd.f32 %v1402, %v1406
        %v1408 = vrot.slane %v1407, 2
        %v1409 = vadd.f32 %v1407, %v1408
        %v1410 = vrot.slane %v1409, 1
        %v1411 = vadd.f32 %v1409, %v1410
        %v1412 = vadd.f32 %v1405, %v1411
        %1413 = vst [vmem:[#allocation11] sm:$0x1] %v1412
        %v1414 = vld [vmem:[#allocation13] sm:$0x1]
        %v1415 = vmul.f32 %v1402, %v1402
        %v1416 = vrot.slane %v1415, 4
        %v1417 = vadd.f32 %v1415, %v1416
        %v1418 = vrot.slane %v1417, 2
        %v1419 = vadd.f32 %v1417, %v1418
        %v1420 = vrot.slane %v1419, 1
        %v1421 = vadd.f32 %v1419, %v1420
        %v1422 = vadd.f32 %v1414, %v1421
        %1423 = vst [vmem:[#allocation13] sm:$0x1] %v1422
        %s1424 = sand.u32 %s160, 1
        %s1425 = scalar_lea.sflag [#allocation4], %s1424
        %s1426 = sand.u32 %s160, 1
        %s1427 = smul.addr %s1426, 4
        %s1428 = scalar_lea.vmem [#allocation10], %s1427
        // Predicated region
        $region57: #{tpu_custom_call.1} parent=35 // pred_check
          %p1429 = pneg %p170
        $region58: #{tpu_custom_call.1} parent=35 // pred_check_branch
          %1431 = sbr.rel (%p1429) target = $region60
        $region59: #{tpu_custom_call.1} parent=35 // pred_region
          %s1433 = ssub.s32 64, 64
          %1434 = vsyncadd %s1425, %s1433
          %s1435 = smul.addr %s33, 8
          %s1436 = sadd.s32 %s34, %s1435
          %s1437 = smul.addr %s1436, 64
          %s1438 = scalar_lea.hbm %s4, %s1437
          %s1440 = sshll.u32 %s1428, 4
          %s1441 = int_to_ptr.vmem [resolvable:$true] %s1440
          %1443 = dma.vmem_to_hbm [thread:$0]  %s1441, 64, %s1438, %s1425
        $region60: #{tpu_custom_call.1} parent=35 // pred_fallthru
          _
        // Predicated region
        $region61: #{tpu_custom_call.1} parent=35 // pred_check
          %p1444 = pneg %p191
        $region62: #{tpu_custom_call.1} parent=35 // pred_check_branch
          %1446 = sbr.rel (%p1444) target = $region64
        $region63: #{tpu_custom_call.1} parent=35 // pred_region
          %s1448 = ssub.s32 16, 16
          %1449 = vsyncadd [#allocation12], %s1448
          %s1451 = sshll.u32 [#allocation11], 4
          %s1452 = int_to_ptr.vmem [resolvable:$true] %s1451
          %1454 = dma.vmem_to_hbm [thread:$0]  %s1452, 16, %s5, [#allocation12]
        $region64: #{tpu_custom_call.1} parent=35 // pred_fallthru
          _
        // Predicated region
        $region65: #{tpu_custom_call.1} parent=35 // pred_check
          %p1455 = pneg %p212
        $region66: #{tpu_custom_call.1} parent=35 // pred_check_branch
          %1457 = sbr.rel (%p1455) target = $region68
        $region67: #{tpu_custom_call.1} parent=35 // pred_region
          %s1459 = ssub.s32 16, 16
          %1460 = vsyncadd [#allocation12], %s1459
          %s1462 = sshll.u32 [#allocation13], 4
          %s1463 = int_to_ptr.vmem [resolvable:$true] %s1462
          %1465 = dma.vmem_to_hbm [thread:$0]  %s1463, 16, %s6, [#allocation12]
        $region68: #{tpu_custom_call.1} parent=35 // pred_fallthru
          _
        // Predicated region
        $region69: #{tpu_custom_call.1} parent=35 // pred_check
          %p1466 = pneg %p191
        $region70: #{tpu_custom_call.1} parent=35 // pred_check_branch
          %1468 = sbr.rel (%p1466) target = $region72
        $region71: #{tpu_custom_call.1} parent=35 // pred_region
          %1469 = dma.done [#allocation12], 16
        $region72: #{tpu_custom_call.1} parent=35 // pred_fallthru
          _
        // Predicated region
        $region73: #{tpu_custom_call.1} parent=35 // pred_check
          %p1470 = pneg %p212
        $region74: #{tpu_custom_call.1} parent=35 // pred_check_branch
          %1472 = sbr.rel (%p1470) target = $region76
        $region75: #{tpu_custom_call.1} parent=35 // pred_region
          %1473 = dma.done [#allocation12], 16
        $region76: #{tpu_custom_call.1} parent=35 // pred_fallthru
          _
      $region36: #{tpu_custom_call.1} parent=5 // pred_fallthru
        _
      %p1474 = scmp.le.s32.totalorder 2, %s24
      // Predicated region
      $region77: #{tpu_custom_call.1} parent=5 // pred_check
        %p1475 = pneg %p1474
      $region78: #{tpu_custom_call.1} parent=5 // pred_check_branch
        %1477 = sbr.rel (%p1475) target = $region80
      $region79: #{tpu_custom_call.1} parent=5 // pred_region
        %s1478 = ssub.s32 %s24, 2
        // Predicated region
        $region81: #{tpu_custom_call.1} parent=79 // pred_check
          %p1479 = pneg %p176
        $region82: #{tpu_custom_call.1} parent=79 // pred_check_branch
          %1481 = sbr.rel (%p1479) target = $region84
        $region83: #{tpu_custom_call.1} parent=79 // pred_region
          %s1482 = sand.u32 %s161, 1
          %s1483 = scalar_lea.sflag [#allocation4], %s1482
          %s1484 = sand.u32 %s161, 1
          %s1485 = smul.addr %s1484, 4
          %s1486 = scalar_lea.vmem [#allocation10], %s1485
          %1487 = dma.done %s1483, 64
        $region84: #{tpu_custom_call.1} parent=79 // pred_fallthru
          _
      $region80: #{tpu_custom_call.1} parent=5 // pred_fallthru
        _
    $region6: #{tpu_custom_call.1} parent=1 // loop_footer
      %s28 = sadd.s32 1, %s24
    $region7: #{tpu_custom_call.1} parent=1 // loop_footer_branch
      %23 = sbr.rel target = $region3
    $region8: #{tpu_custom_call.1} parent=1 // loop_exit
      _
    %1488 = vsyncpa [#allocation3], 1
    %s1489 = scalar_lea.sflag [#allocation3], 1
    %1490 = vsyncpa %s1489, 1
    %1491 = vsyncpa [#allocation6], 1
    %s1492 = scalar_lea.sflag [#allocation6], 1
    %1493 = vsyncpa %s1492, 1
    %1494 = vsyncpa [#allocation9], 1
    %1495 = vsyncpa [#allocation4], 1
    %s1496 = scalar_lea.sflag [#allocation4], 1
    %1497 = vsyncpa %s1496, 1
    %1498 = vsyncpa [#allocation12], 1

</llo_original>
